<compile_context>
chip_gen: v6e
topology: v6e:2x2x1
jax: 0.10.0
libtpu: 0.0.40
codegen_flags: <defaults>
</compile_context>

<pallas_src>
import functools

import jax
import jax.numpy as jnp
import numpy as np
from jax.experimental import pallas as pl
from jax.experimental.pallas import tpu as pltpu

H = 7
W = 7
P = H * W            # 49 pixels
CONV_OUT = 100
FC_OUT = 49
OUT_PAD = 128        # lane-dense output width (cols 49..127 are zero and sliced off)

# Activation-tile VMEM budget target; chosen so total usage (+25% headroom) stays
# well under v7x's 64 MiB physical VMEM while still allowing large tiles.
_TARGET_VMEM_BYTES = 36 * 1024 * 1024


def _round_up(x, m):
    return (x + m - 1) // m * m


def fold_ms_task_params(conv_w, conv_b, fc_w, fc_b, *, compute_dtype=jnp.bfloat16):
    """One-time (init) algebraic fold of the 1x1 conv into the FC layer.

    conv_w: (100, C, 1, 1), conv_b: (100,), fc_w: (49, 4900), fc_b: (49,)
    Returns:
      w_fused: (C*49, 128) in `compute_dtype`, columns 49..127 zero
               (row index = c*49 + h*7 + w, matching torch.flatten on NCHW)
      b_fused: (1, 128) float32, columns 49..127 zero
    """
    C = conv_w.shape[1]
    conv_w2 = conv_w.reshape(CONV_OUT, C).astype(jnp.float32)        # (co, c)
    fc_w3 = fc_w.reshape(FC_OUT, CONV_OUT, P).astype(jnp.float32)    # (j, co, p)

    # W_fused[c, p, j] = sum_co fc_w[j, co, p] * conv_w[co, c]
    w_fused = jnp.einsum(
        "jop,oc->cpj", fc_w3, conv_w2,
        precision=jax.lax.Precision.HIGHEST,   # init-time only; not in the hot path
    ).reshape(C * P, FC_OUT)

    # b_fused[j] = fc_b[j] + sum_{co,p} fc_w[j, co, p] * conv_b[co]
    b_fused = fc_b.astype(jnp.float32) + jnp.einsum(
        "jop,o->j", fc_w3, conv_b.astype(jnp.float32),
        precision=jax.lax.Precision.HIGHEST,
    )

    # Lane-pad to 128 output columns (dense weight DMA, unmasked output stores).
    w_pad = jnp.zeros((C * P, OUT_PAD), jnp.float32).at[:, :FC_OUT].set(w_fused)
    b_pad = jnp.zeros((1, OUT_PAD), jnp.float32).at[0, :FC_OUT].set(b_fused)
    # NOTE: at very large C the bf16 weight fold loses ~sqrt(K) precision; pass
    # compute_dtype=jnp.float32 here if bit-level closeness to PyTorch is needed.
    return w_pad.astype(compute_dtype), b_pad


def _choose_tn(N, K, block_n):
    """Batch-tile rows: multiple of 16, VMEM-budgeted, >=2 grid steps when possible."""
    per_row = 2 * K * 4 + 2 * OUT_PAD * 4          # dbl-buffered f32 act + f32 out
    fixed = K * OUT_PAD * 2 + OUT_PAD * 4          # single-buffered bf16 weight + bias
    avail = max(_TARGET_VMEM_BYTES - fixed, 16 * per_row)
    tn_cap = max(16, (avail // per_row) // 16 * 16)
    tn = min(block_n, tn_cap, _round_up(N, 16))
    if N >= 32:
        # Ensure at least 2 grid iterations (feeds both v7x TensorCores, enables
        # DMA/compute overlap).
        tn = min(tn, max(16, _round_up(pl.cdiv(N, 2), 16)))
    return max(tn, 16)


def _vmem_limit_bytes(tn, K):
    usage = (2 * tn * K * 4            # double-buffered f32 activation tiles
             + K * OUT_PAD * 2         # single-buffered bf16 weight
             + OUT_PAD * 4             # bias
             + 2 * tn * OUT_PAD * 4)   # double-buffered f32 output tiles
    # Headroom, but never above ~56 MiB (safe on v7x's 64 MiB physical VMEM).
    return min(max(int(usage * 1.25) + (4 << 20), 32 << 20), 56 << 20)


def _fused_fc_kernel(x_ref, w_ref, b_ref, o_ref):
    # x_ref: (tn, K) f32 streamed from HBM -> cast to bf16 in-VMEM (saves an HBM pass)
    # w_ref: (K, 128) bf16, VMEM-resident (constant index_map, single-buffered)
    # b_ref: (1, 128) f32 | o_ref: (tn, 128) f32
    x_bf16 = x_ref[...].astype(jnp.bfloat16)
    acc = jnp.dot(x_bf16, w_ref[...], preferred_element_type=jnp.float32)
    o_ref[...] = acc + b_ref[...]   # bias broadcasts over the batch (sublane) axis


@functools.partial(jax.jit, static_argnames=("block_n",))
def ms_task_forward(x_nchw, w_fused, b_fused, *, block_n=512):
    """x_nchw: (N, C, 7, 7) float32; w_fused/b_fused from fold_ms_task_params.
    Returns (N, 49) float32 — identical math to conv -> flatten -> fc."""
    N, C, h, w = x_nchw.shape
    assert (h, w) == (H, W), "MS_task fc layer requires 7x7 spatial input"
    K = C * P

    # torch.flatten(x, 1) ordering on NCHW: flat index = c*49 + h*7 + w.
    # Pure metadata reshape; activations stay f32 (no extra HBM pass here).
    x_flat = x_nchw.reshape(N, K)

    tn = _choose_tn(N, K, block_n)
    grid = (pl.cdiv(N, tn),)   # ragged last block handled by Pallas (no jnp.pad)

    out = pl.pallas_call(
        _fused_fc_kernel,
        out_shape=jax.ShapeDtypeStruct((N, OUT_PAD), jnp.float32),
        grid=grid,
        in_specs=[
            # Streamed activation tiles (double-buffered by the pipeline).
            pl.BlockSpec((tn, K), lambda i: (i, 0)),
            # Weight / bias: constant block -> stays resident; single buffer suffices.
            pl.BlockSpec((K, OUT_PAD), lambda i: (0, 0),
                         pipeline_mode=pl.Buffered(1)),
            pl.BlockSpec((1, OUT_PAD), lambda i: (0, 0),
                         pipeline_mode=pl.Buffered(1)),
        ],
        out_specs=pl.BlockSpec((tn, OUT_PAD), lambda i: (i, 0)),
        compiler_params=pltpu.CompilerParams(
            dimension_semantics=("parallel",),           # megacore-splittable batch axis
            vmem_limit_bytes=_vmem_limit_bytes(tn, K),   # large-C tiles exceed default limits
        ),
        cost_estimate=pl.CostEstimate(
            flops=2 * N * K * OUT_PAD,
            bytes_accessed=N * K * 4 + K * OUT_PAD * 2 + N * OUT_PAD * 4,
            transcendentals=0,
        ),
    )(x_flat, w_fused, b_fused)

    return out[:, :FC_OUT]


def ms_task_reference(x_nchw, conv_w, conv_b, fc_w, fc_b):
    """Plain-JAX f32 reference reproducing the PyTorch forward (unfused)."""
    N = x_nchw.shape[0]
    y = jnp.einsum(
        "oc,nchw->nohw", conv_w[:, :, 0, 0], x_nchw,
        precision=jax.lax.Precision.HIGHEST,
    ) + conv_b[None, :, None, None]
    flat = y.reshape(N, -1)
    return jnp.dot(flat, fc_w.T, precision=jax.lax.Precision.HIGHEST) + fc_b


if __name__ == "__main__":
    # Small deterministic setup (input_ch reduced from 512 to 64; spatial must be
    # 7x7 because of the 7*7*100 -> 49 Linear layer). N=32 exercises a 2-step grid.
    N, C = 32, 64

    key = jax.random.PRNGKey(0)
    k_x, k_cw, k_cb, k_fw, k_fb = jax.random.split(key, 5)

    x = jax.random.normal(k_x, (N, C, H, W), dtype=jnp.float32)
    conv_w = 0.05 * jax.random.normal(k_cw, (CONV_OUT, C, 1, 1), dtype=jnp.float32)
    conv_b = 0.05 * jax.random.normal(k_cb, (CONV_OUT,), dtype=jnp.float32)
    fc_w = 0.02 * jax.random.normal(k_fw, (FC_OUT, CONV_OUT * P), dtype=jnp.float32)
    fc_b = 0.02 * jax.random.normal(k_fb, (FC_OUT,), dtype=jnp.float32)

    # One-time weight fold (init), then a single fused Pallas matmul per forward.
    w_fused, b_fused = fold_ms_task_params(conv_w, conv_b, fc_w, fc_b)

    out = jax.block_until_ready(ms_task_forward(x, w_fused, b_fused))

    ref = ms_task_reference(x, conv_w, conv_b, fc_w, fc_b)
    # bf16 operands + f32 accumulation vs an f32 HIGHEST reference: tolerance sized
    # for bf16 rounding over a K=3136 contraction (outputs are O(0.5)).
    np.testing.assert_allclose(np.asarray(out), np.asarray(ref), rtol=2e-2, atol=3e-2)
    assert out.shape == (N, FC_OUT)

    print("KERNEL_OK")
</pallas_src>

<mosaic_0001>
module attributes {stable_mosaic.version = 11 : i64} {
  func.func @_fused_fc_kernel(%arg0: i32, %arg1: memref<16x3136xf32, #tpu.memory_space<vmem>>, %arg2: memref<3136x128xbf16, #tpu.memory_space<vmem>>, %arg3: memref<1x128xf32, #tpu.memory_space<vmem>>, %arg4: memref<16x128xf32, #tpu.memory_space<vmem>>) attributes {dimension_semantics = [#tpu.dimension_semantics<parallel>], iteration_bounds = array<i64: 2>, scalar_prefetch = 0 : i64, scratch_operands = 0 : i64, tpu.core_type = #tpu.core_type<tc>, window_params = [{transform_indices = @transform_0, window_bounds = array<i64: 16, 3136>}, {pipeline_mode = #tpu.pipeline_mode<synchronous>, transform_indices = @transform_1, window_bounds = array<i64: 3136, 128>}, {pipeline_mode = #tpu.pipeline_mode<synchronous>, transform_indices = @transform_2, window_bounds = array<i64: 1, 128>}, {transform_indices = @transform_3, window_bounds = array<i64: 16, 128>}]} {
    %c0 = arith.constant 0 : index
    %c0_0 = arith.constant 0 : index
    %0 = vector.load %arg1[%c0, %c0_0] : memref<16x3136xf32, #tpu.memory_space<vmem>>, vector<16x3136xf32>
    %1 = arith.truncf %0 : vector<16x3136xf32> to vector<16x3136xbf16>
    %c0_1 = arith.constant 0 : index
    %c0_2 = arith.constant 0 : index
    %2 = vector.load %arg2[%c0_1, %c0_2] : memref<3136x128xbf16, #tpu.memory_space<vmem>>, vector<3136x128xbf16>
    %cst = arith.constant dense<0.000000e+00> : vector<16x128xf32>
    %3 = tpu.matmul %1, %2, %cst {dimension_numbers = #tpu.dot_dimension_numbers<[1], [0], [0], [1], [0, 0, 1, 1], [], []>} : vector<16x3136xbf16>, vector<3136x128xbf16>, vector<16x128xf32> -> vector<16x128xf32>
    %c0_3 = arith.constant 0 : index
    %c0_4 = arith.constant 0 : index
    %4 = vector.load %arg3[%c0_3, %c0_4] : memref<1x128xf32, #tpu.memory_space<vmem>>, vector<1x128xf32>
    %5 = vector.broadcast %4 : vector<1x128xf32> to vector<16x128xf32>
    %6 = arith.addf %3, %5 : vector<16x128xf32>
    %c0_5 = arith.constant 0 : index
    %c0_6 = arith.constant 0 : index
    %7 = vector.load %arg4[%c0_5, %c0_6] : memref<16x128xf32, #tpu.memory_space<vmem>>, vector<16x128xf32>
    tpu.vector_store %arg4[%c0_5, %c0_6], %6 {strides = array<i32>} : memref<16x128xf32, #tpu.memory_space<vmem>>, vector<16x128xf32>,
    return
  }
  func.func @transform_0(%arg0: i32) -> (i32, i32) {
    %c0_i32 = arith.constant 0 : i32
    %c0_i32_0 = arith.constant 0 : i32
    return %arg0, %c0_i32 : i32, i32
  }
  func.func @transform_1(%arg0: i32) -> (i32, i32) {
    %c0_i32 = arith.constant 0 : i32
    %c0_i32_0 = arith.constant 0 : i32
    %c0_i32_1 = arith.constant 0 : i32
    return %c0_i32, %c0_i32_0 : i32, i32
  }
  func.func @transform_2(%arg0: i32) -> (i32, i32) {
    %c0_i32 = arith.constant 0 : i32
    %c0_i32_0 = arith.constant 0 : i32
    %c0_i32_1 = arith.constant 0 : i32
    return %c0_i32, %c0_i32_0 : i32, i32
  }
  func.func @transform_3(%arg0: i32) -> (i32, i32) {
    %c0_i32 = arith.constant 0 : i32
    %c0_i32_0 = arith.constant 0 : i32
    return %arg0, %c0_i32 : i32, i32
  }
}

</mosaic_0001>

<llo_original>
// kernel: ms_task_forward.1
$region0: #{ms_task_forward.1}
  #allocation0 [shape = 'u32[]', space=smem, size = 0x4, offset = 0x4, fixed_abs, tag = 'smem constant byte address 0x4 - core index']
  #allocation1 [shape = 'u32[144,128]{1,0:T(1,128)}', space=vmem, size = 0x12000, scoped, tag = 'internal scratch']
  %s0 = inlined_call_operand.vmem [shape: f32[32,3136], index: 0, kind: input, shape index: {}]
  %s1 = inlined_call_operand.vmem [shape: bf16[3136,128], index: 1, kind: input, shape index: {}]
  %s2 = inlined_call_operand.vmem [shape: f32[1,128], index: 2, kind: input, shape index: {}]
  %s3 = inlined_call_operand.hbm [shape: f32[32,128], index: 3, kind: output, shape index: {}]
  %s4 = sld [smem:[#allocation0]]
  $region45: #{ms_task_forward.1} parent=0
    _
  %s6 = ssub.s32 1, %s4
  %s7 = scalar_select 0, %s6, %s4
  $region1: #{ms_task_forward.1} parent=0
    #allocation2 [shape = 'u8[16384]{0}', space=vmem, size = 0x4000, scoped, tag = 'output window, operand 0']
    #allocation3 [shape = 's32[2]{0}', space=sflag, size = 0x8, scoped, tag = 'scoped memory for ms_task_forward.1']
    %8 = vsyncpa [#allocation3], 0
    %s9 = scalar_lea.sflag [#allocation3], 1
    %10 = vsyncpa %s9, 0
    loop: start=0, step=1, limit=4
    $region2: #{ms_task_forward.1} parent=1 // loop_pre_header
      _
    $region3: #{ms_task_forward.1} parent=1 // loop_header
      %s12 = sphi 0, %s16
      %p13 = scmp.ge.s32.totalorder %s12, 4
      %s22 = sphi 0, %s24
      %s25 = sphi 0, %s22
      %s26 = sphi 0, %s25
      %s42 = sphi 0, %s26
      %s46 = sphi 0, %s46
      %s48 = sphi 0, %s46
      %s49 = sphi 0, %s48
      %s63 = sphi 0, %s49
      %s67 = sphi 0, %s67
      %s69 = sphi 0, %s67
      %s70 = sphi 0, %s69
      %s84 = sphi 0, %s70
      %s90 = sphi 0, %s92
      %s93 = sphi 0, %s90
      %s94 = sphi 0, %s93
      %s110 = sphi 0, %s94
    $region4: #{ms_task_forward.1} parent=1 // loop_header_branch
      %15 = sbr.rel (%p13) target = $region8
    $region5: #{ms_task_forward.1} parent=1 // loop_body
      %s17 = ssub.s32 %s12, 1
      %s18 = ssub.s32 %s12, 2
      %s19 = sadd.s32 %s12, 1
      %s20 = ssub.s32 %s12, %s19
      %p21 = scmp.eq.s32.totalorder %s20, 0
      %s23 = sadd.s32 %s22, 1
      %s24 = scalar_select %p21, %s22, %s23
      %p27 = pneg %p21
      %p28 = scmp.eq.s32.totalorder %s12, 1
      %p29 = por %p27, %p28
      %p30 = scmp.ne.s32.totalorder %s22, %s25
      %p31 = scmp.eq.s32.totalorder %s12, 0
      %p32 = por %p30, %p31
      %p33 = scmp.ne.s32.totalorder %s22, %s25
      %p34 = scmp.eq.s32.totalorder %s17, 1
      %p35 = por %p33, %p34
      %p36 = scmp.ne.s32.totalorder %s25, %s26
      %p37 = scmp.eq.s32.totalorder %s17, 0
      %p38 = por %p36, %p37
      %p39 = scmp.ne.s32.totalorder %s25, %s26
      %p40 = scmp.eq.s32.totalorder %s18, 1
      %p41 = por %p39, %p40
      %p43 = scmp.ne.s32.totalorder %s26, %s42
      %p44 = scmp.eq.s32.totalorder %s18, 0
      %p45 = por %p43, %p44
      %s47 = sadd.s32 %s46, 1
      %p50 = scmp.eq.s32.totalorder %s12, 1
      %p51 = scmp.ne.s32.totalorder %s46, %s48
      %p52 = scmp.eq.s32.totalorder %s12, 0
      %p53 = por %p51, %p52
      %p54 = scmp.ne.s32.totalorder %s46, %s48
      %p55 = scmp.eq.s32.totalorder %s17, 1
      %p56 = por %p54, %p55
      %p57 = scmp.ne.s32.totalorder %s48, %s49
      %p58 = scmp.eq.s32.totalorder %s17, 0
      %p59 = por %p57, %p58
      %p60 = scmp.ne.s32.totalorder %s48, %s49
      %p61 = scmp.eq.s32.totalorder %s18, 1
      %p62 = por %p60, %p61
      %p64 = scmp.ne.s32.totalorder %s49, %s63
      %p65 = scmp.eq.s32.totalorder %s18, 0
      %p66 = por %p64, %p65
      %s68 = sadd.s32 %s67, 1
      %p71 = scmp.eq.s32.totalorder %s12, 1
      %p72 = scmp.ne.s32.totalorder %s67, %s69
      %p73 = scmp.eq.s32.totalorder %s12, 0
      %p74 = por %p72, %p73
      %p75 = scmp.ne.s32.totalorder %s67, %s69
      %p76 = scmp.eq.s32.totalorder %s17, 1
      %p77 = por %p75, %p76
      %p78 = scmp.ne.s32.totalorder %s69, %s70
      %p79 = scmp.eq.s32.totalorder %s17, 0
      %p80 = por %p78, %p79
      %p81 = scmp.ne.s32.totalorder %s69, %s70
      %p82 = scmp.eq.s32.totalorder %s18, 1
      %p83 = por %p81, %p82
      %p85 = scmp.ne.s32.totalorder %s70, %s84
      %p86 = scmp.eq.s32.totalorder %s18, 0
      %p87 = por %p85, %p86
      %s88 = ssub.s32 %s12, %s19
      %p89 = scmp.eq.s32.totalorder %s88, 0
      %s91 = sadd.s32 %s90, 1
      %s92 = scalar_select %p89, %s90, %s91
      %p95 = pneg %p89
      %p96 = scmp.eq.s32.totalorder %s12, 1
      %p97 = por %p95, %p96
      %p98 = scmp.ne.s32.totalorder %s90, %s93
      %p99 = scmp.eq.s32.totalorder %s12, 0
      %p100 = por %p98, %p99
      %p101 = scmp.ne.s32.totalorder %s90, %s93
      %p102 = scmp.eq.s32.totalorder %s17, 1
      %p103 = por %p101, %p102
      %p104 = scmp.ne.s32.totalorder %s93, %s94
      %p105 = scmp.eq.s32.totalorder %s17, 0
      %p106 = por %p104, %p105
      %p107 = scmp.ne.s32.totalorder %s93, %s94
      %p108 = scmp.eq.s32.totalorder %s18, 1
      %p109 = por %p107, %p108
      %p111 = scmp.ne.s32.totalorder %s94, %s110
      %p112 = scmp.eq.s32.totalorder %s18, 0
      %p113 = por %p111, %p112
      %p114 = scmp.le.s32.totalorder 1, %s12
      %p115 = scmp.lt.s32.totalorder %s12, 3
      %p116 = pnand %p114, %p115
      %p117 = pneg %p116
      // Predicated region
      $region9: #{ms_task_forward.1} parent=5 // pred_check
        _
      $region10: #{ms_task_forward.1} parent=5 // pred_check_branch
        %119 = sbr.rel (%p116) target = $region12
      $region11: #{ms_task_forward.1} parent=5 // pred_region
        %s120 = ssub.s32 %s12, 1
        // Predicated region
        $region13: #{ms_task_forward.1} parent=11 // pred_check
          %p121 = pneg %p59
        $region14: #{ms_task_forward.1} parent=11 // pred_check_branch
          %123 = sbr.rel (%p121) target = $region16
        $region15: #{ms_task_forward.1} parent=11 // pred_region
          _
        $region16: #{ms_task_forward.1} parent=11 // pred_fallthru
          _
        // Predicated region
        $region17: #{ms_task_forward.1} parent=11 // pred_check
          %p124 = pneg %p80
        $region18: #{ms_task_forward.1} parent=11 // pred_check_branch
          %126 = sbr.rel (%p124) target = $region20
        $region19: #{ms_task_forward.1} parent=11 // pred_region
          _
        $region20: #{ms_task_forward.1} parent=11 // pred_fallthru
          _
      $region12: #{ms_task_forward.1} parent=5 // pred_fallthru
        _
      %p127 = scmp.lt.s32.totalorder %s12, 2
      // Predicated region
      $region21: #{ms_task_forward.1} parent=5 // pred_check
        %p128 = pneg %p127
      $region22: #{ms_task_forward.1} parent=5 // pred_check_branch
        %130 = sbr.rel (%p128) target = $region24
      $region23: #{ms_task_forward.1} parent=5 // pred_region
        // Predicated region
        $region25: #{ms_task_forward.1} parent=23 // pred_check
          %p131 = pneg %p32
        $region26: #{ms_task_forward.1} parent=23 // pred_check_branch
          %133 = sbr.rel (%p131) target = $region28
        $region27: #{ms_task_forward.1} parent=23 // pred_region
          %s134 = smul.u32 2, %s12
          %p135 = scmp.lt.s32.totalorder %s134, 3
          %s136 = scalar_select %p135, %s134, 3
          %s137 = smul.addr %s136, 25
          %s138 = smul.addr %s137, 8
          %s139 = scalar_lea.vmem %s0, %s138
          %s140 = smul.u32 2, %s12
        $region28: #{ms_task_forward.1} parent=23 // pred_fallthru
          _
      $region24: #{ms_task_forward.1} parent=5 // pred_fallthru
        _
      %p141 = scmp.le.s32.totalorder 1, %s12
      %p142 = scmp.lt.s32.totalorder %s12, 3
      %p143 = pnand %p141, %p142
      %p144 = pneg %p143
      // Predicated region
      $region29: #{ms_task_forward.1} parent=5 // pred_check
        _
      $region30: #{ms_task_forward.1} parent=5 // pred_check_branch
        %146 = sbr.rel (%p143) target = $region32
      $region31: #{ms_task_forward.1} parent=5 // pred_region
        %s147 = ssub.s32 %s12, 1
        %s148 = smul.u32 2, %s17
        %p149 = scmp.lt.s32.totalorder %s148, 3
        %s150 = scalar_select %p149, %s148, 3
        %s151 = smul.addr %s150, 25
        %s152 = smul.addr %s151, 8
        %s153 = scalar_lea.vmem %s0, %s152
        %p154 = pneg %p38
        %p155 = pneg %p35
        %p156 = pneg %p59
        %p157 = pneg %p56
        %p158 = pneg %p80
        %p159 = pneg %p77
        %p160 = pneg %p106
        %p161 = pneg %p103
        %s162 = sand.u32 %s93, 1
        %s163 = scalar_lea.sflag [#allocation3], %s162
        %s164 = sand.u32 %s93, 1
        %s165 = smul.addr %s164, 16
        %s166 = scalar_lea.vmem [#allocation2], %s165
        %s167 = smul.u32 2, %s17
        %p168 = scmp.lt.s32.totalorder %s167, 3
        %s169 = scalar_select %p168, %s167, 3
        %s170 = smul.addr %s169, 25
        %s171 = smul.addr %s170, 8
        %s172 = scalar_lea.vmem %s0, %s171
        %s173 = smul.u32 2, %s17
        %s174 = smul.u32 2, %s17
        %v176 = vld [vmem:[%s172] sm:$0xff]
        %v177 = vld [vmem:[%s172 + $0x8] sm:$0xff]
        %v178 = vld [vmem:[%s172 + $0x10] sm:$0xff]
        %v179 = vld [vmem:[%s172 + $0x18] sm:$0xff]
        %v180 = vld [vmem:[%s172 + $0x20] sm:$0xff]
        %v181 = vld [vmem:[%s172 + $0x28] sm:$0xff]
        %v182 = vld [vmem:[%s172 + $0x30] sm:$0xff]
        %v183 = vld [vmem:[%s172 + $0x38] sm:$0xff]
        %v184 = vld [vmem:[%s172 + $0x40] sm:$0xff]
        %v185 = vld [vmem:[%s172 + $0x48] sm:$0xff]
        %v186 = vld [vmem:[%s172 + $0x50] sm:$0xff]
        %v187 = vld [vmem:[%s172 + $0x58] sm:$0xff]
        %v188 = vld [vmem:[%s172 + $0x60] sm:$0xff]
        %v189 = vld [vmem:[%s172 + $0x68] sm:$0xff]
        %v190 = vld [vmem:[%s172 + $0x70] sm:$0xff]
        %v191 = vld [vmem:[%s172 + $0x78] sm:$0xff]
        %v192 = vld [vmem:[%s172 + $0x80] sm:$0xff]
        %v193 = vld [vmem:[%s172 + $0x88] sm:$0xff]
        %v194 = vld [vmem:[%s172 + $0x90] sm:$0xff]
        %v195 = vld [vmem:[%s172 + $0x98] sm:$0xff]
        %v196 = vld [vmem:[%s172 + $0xa0] sm:$0xff]
        %v197 = vld [vmem:[%s172 + $0xa8] sm:$0xff]
        %v198 = vld [vmem:[%s172 + $0xb0] sm:$0xff]
        %v199 = vld [vmem:[%s172 + $0xb8] sm:$0xff]
        %v200 = vld [vmem:[%s172 + $0xc0] sm:$0xff]
        %v201 = vld [vmem:[%s172 + $0xc8] sm:$0xff]
        %v202 = vld [vmem:[%s172 + $0xd0] sm:$0xff]
        %v203 = vld [vmem:[%s172 + $0xd8] sm:$0xff]
        %v204 = vld [vmem:[%s172 + $0xe0] sm:$0xff]
        %v205 = vld [vmem:[%s172 + $0xe8] sm:$0xff]
        %v206 = vld [vmem:[%s172 + $0xf0] sm:$0xff]
        %v207 = vld [vmem:[%s172 + $0xf8] sm:$0xff]
        %v208 = vld [vmem:[%s172 + $0x100] sm:$0xff]
        %v209 = vld [vmem:[%s172 + $0x108] sm:$0xff]
        %v210 = vld [vmem:[%s172 + $0x110] sm:$0xff]
        %v211 = vld [vmem:[%s172 + $0x118] sm:$0xff]
        %v212 = vld [vmem:[%s172 + $0x120] sm:$0xff]
        %v213 = vld [vmem:[%s172 + $0x128] sm:$0xff]
        %v214 = vld [vmem:[%s172 + $0x130] sm:$0xff]
        %v215 = vld [vmem:[%s172 + $0x138] sm:$0xff]
        %v216 = vld [vmem:[%s172 + $0x140] sm:$0xff]
        %v217 = vld [vmem:[%s172 + $0x148] sm:$0xff]
        %v218 = vld [vmem:[%s172 + $0x150] sm:$0xff]
        %v219 = vld [vmem:[%s172 + $0x158] sm:$0xff]
        %v220 = vld [vmem:[%s172 + $0x160] sm:$0xff]
        %v221 = vld [vmem:[%s172 + $0x168] sm:$0xff]
        %v222 = vld [vmem:[%s172 + $0x170] sm:$0xff]
        %v223 = vld [vmem:[%s172 + $0x178] sm:$0xff]
        %v224 = vld [vmem:[%s172 + $0x180] sm:$0xff]
        %v225 = vld [vmem:[%s172 + $0x188] sm:$0xff]
        %v226 = vpack.c.bf16 %v201, %v176
        %v227 = vpack.c.bf16 %v202, %v177
        %v228 = vpack.c.bf16 %v203, %v178
        %v229 = vpack.c.bf16 %v204, %v179
        %v230 = vpack.c.bf16 %v205, %v180
        %v231 = vpack.c.bf16 %v206, %v181
        %v232 = vpack.c.bf16 %v207, %v182
        %v233 = vpack.c.bf16 %v208, %v183
        %v234 = vpack.c.bf16 %v209, %v184
        %v235 = vpack.c.bf16 %v210, %v185
        %v236 = vpack.c.bf16 %v211, %v186
        %v237 = vpack.c.bf16 %v212, %v187
        %v238 = vpack.c.bf16 %v213, %v188
        %v239 = vpack.c.bf16 %v214, %v189
        %v240 = vpack.c.bf16 %v215, %v190
        %v241 = vpack.c.bf16 %v216, %v191
        %v242 = vpack.c.bf16 %v217, %v192
        %v243 = vpack.c.bf16 %v218, %v193
        %v244 = vpack.c.bf16 %v219, %v194
        %v245 = vpack.c.bf16 %v220, %v195
        %v246 = vpack.c.bf16 %v221, %v196
        %v247 = vpack.c.bf16 %v222, %v197
        %v248 = vpack.c.bf16 %v223, %v198
        %v249 = vpack.c.bf16 %v224, %v199
        %v250 = vpack.c.bf16 %v225, %v200
        %v251 = vld [vmem:[%s1] sm:$0xf]
        %v252 = vld [vmem:[%s1 + $0x4] sm:$0xf]
        %v253 = vld [vmem:[%s1 + $0x8] sm:$0xf]
        %v254 = vld [vmem:[%s1 + $0xc] sm:$0xf]
        %v255 = vld [vmem:[%s1 + $0x10] sm:$0xf]
        %v256 = vld [vmem:[%s1 + $0x14] sm:$0xf]
        %v257 = vld [vmem:[%s1 + $0x18] sm:$0xf]
        %v258 = vld [vmem:[%s1 + $0x1c] sm:$0xf]
        %v259 = vld [vmem:[%s1 + $0x20] sm:$0xf]
        %v260 = vld [vmem:[%s1 + $0x24] sm:$0xf]
        %v261 = vld [vmem:[%s1 + $0x28] sm:$0xf]
        %v262 = vld [vmem:[%s1 + $0x2c] sm:$0xf]
        %v263 = vld [vmem:[%s1 + $0x30] sm:$0xf]
        %v264 = vld [vmem:[%s1 + $0x34] sm:$0xf]
        %v265 = vld [vmem:[%s1 + $0x38] sm:$0xf]
        %v266 = vld [vmem:[%s1 + $0x3c] sm:$0xf]
        %v267 = vld [vmem:[%s1 + $0x40] sm:$0xf]
        %v268 = vld [vmem:[%s1 + $0x44] sm:$0xf]
        %v269 = vld [vmem:[%s1 + $0x48] sm:$0xf]
        %v270 = vld [vmem:[%s1 + $0x4c] sm:$0xf]
        %v271 = vld [vmem:[%s1 + $0x50] sm:$0xf]
        %v272 = vld [vmem:[%s1 + $0x54] sm:$0xf]
        %v273 = vld [vmem:[%s1 + $0x58] sm:$0xf]
        %v274 = vld [vmem:[%s1 + $0x5c] sm:$0xf]
        %v275 = vld [vmem:[%s1 + $0x60] sm:$0xf]
        %v276 = vld [vmem:[%s1 + $0x64] sm:$0xf]
        %v277 = vld [vmem:[%s1 + $0x68] sm:$0xf]
        %v278 = vld [vmem:[%s1 + $0x6c] sm:$0xf]
        %v279 = vld [vmem:[%s1 + $0x70] sm:$0xf]
        %v280 = vld [vmem:[%s1 + $0x74] sm:$0xf]
        %v281 = vld [vmem:[%s1 + $0x78] sm:$0xf]
        %v282 = vld [vmem:[%s1 + $0x7c] sm:$0xf]
        %v283 = vld [vmem:[%s1 + $0x80] sm:$0xf]
        %v284 = vld [vmem:[%s1 + $0x84] sm:$0xf]
        %v285 = vld [vmem:[%s1 + $0x88] sm:$0xf]
        %v286 = vld [vmem:[%s1 + $0x8c] sm:$0xf]
        %v287 = vld [vmem:[%s1 + $0x90] sm:$0xf]
        %v288 = vld [vmem:[%s1 + $0x94] sm:$0xf]
        %v289 = vld [vmem:[%s1 + $0x98] sm:$0xf]
        %v290 = vld [vmem:[%s1 + $0x9c] sm:$0xf]
        %v291 = vld [vmem:[%s1 + $0xa0] sm:$0xf]
        %v292 = vld [vmem:[%s1 + $0xa4] sm:$0xf]
        %v293 = vld [vmem:[%s1 + $0xa8] sm:$0xf]
        %v294 = vld [vmem:[%s1 + $0xac] sm:$0xf]
        %v295 = vld [vmem:[%s1 + $0xb0] sm:$0xf]
        %v296 = vld [vmem:[%s1 + $0xb4] sm:$0xf]
        %v297 = vld [vmem:[%s1 + $0xb8] sm:$0xf]
        %v298 = vld [vmem:[%s1 + $0xbc] sm:$0xf]
        %v299 = vld [vmem:[%s1 + $0xc0] sm:$0xf]
        %v300 = vld [vmem:[%s1 + $0xc4] sm:$0xf]
        %v301 = vld [vmem:[%s1 + $0xc8] sm:$0xf]
        %v302 = vld [vmem:[%s1 + $0xcc] sm:$0xf]
        %v303 = vld [vmem:[%s1 + $0xd0] sm:$0xf]
        %v304 = vld [vmem:[%s1 + $0xd4] sm:$0xf]
        %v305 = vld [vmem:[%s1 + $0xd8] sm:$0xf]
        %v306 = vld [vmem:[%s1 + $0xdc] sm:$0xf]
        %v307 = vld [vmem:[%s1 + $0xe0] sm:$0xf]
        %v308 = vld [vmem:[%s1 + $0xe4] sm:$0xf]
        %v309 = vld [vmem:[%s1 + $0xe8] sm:$0xf]
        %v310 = vld [vmem:[%s1 + $0xec] sm:$0xf]
        %v311 = vld [vmem:[%s1 + $0xf0] sm:$0xf]
        %v312 = vld [vmem:[%s1 + $0xf4] sm:$0xf]
        %v313 = vld [vmem:[%s1 + $0xf8] sm:$0xf]
        %v314 = vld [vmem:[%s1 + $0xfc] sm:$0xf]
        %v315 = vld [vmem:[%s1 + $0x100] sm:$0xf]
        %v316 = vld [vmem:[%s1 + $0x104] sm:$0xf]
        %v317 = vld [vmem:[%s1 + $0x108] sm:$0xf]
        %v318 = vld [vmem:[%s1 + $0x10c] sm:$0xf]
        %v319 = vld [vmem:[%s1 + $0x110] sm:$0xf]
        %v320 = vld [vmem:[%s1 + $0x114] sm:$0xf]
        %v321 = vld [vmem:[%s1 + $0x118] sm:$0xf]
        %v322 = vld [vmem:[%s1 + $0x11c] sm:$0xf]
        %v323 = vld [vmem:[%s1 + $0x120] sm:$0xf]
        %v324 = vld [vmem:[%s1 + $0x124] sm:$0xf]
        %v325 = vld [vmem:[%s1 + $0x128] sm:$0xf]
        %v326 = vld [vmem:[%s1 + $0x12c] sm:$0xf]
        %v327 = vld [vmem:[%s1 + $0x130] sm:$0xf]
        %v328 = vld [vmem:[%s1 + $0x134] sm:$0xf]
        %v329 = vld [vmem:[%s1 + $0x138] sm:$0xf]
        %v330 = vld [vmem:[%s1 + $0x13c] sm:$0xf]
        %v331 = vld [vmem:[%s1 + $0x140] sm:$0xf]
        %v332 = vld [vmem:[%s1 + $0x144] sm:$0xf]
        %v333 = vld [vmem:[%s1 + $0x148] sm:$0xf]
        %v334 = vld [vmem:[%s1 + $0x14c] sm:$0xf]
        %v335 = vld [vmem:[%s1 + $0x150] sm:$0xf]
        %v336 = vld [vmem:[%s1 + $0x154] sm:$0xf]
        %v337 = vld [vmem:[%s1 + $0x158] sm:$0xf]
        %v338 = vld [vmem:[%s1 + $0x15c] sm:$0xf]
        %v339 = vld [vmem:[%s1 + $0x160] sm:$0xf]
        %v340 = vld [vmem:[%s1 + $0x164] sm:$0xf]
        %v341 = vld [vmem:[%s1 + $0x168] sm:$0xf]
        %v342 = vld [vmem:[%s1 + $0x16c] sm:$0xf]
        %v343 = vld [vmem:[%s1 + $0x170] sm:$0xf]
        %v344 = vld [vmem:[%s1 + $0x174] sm:$0xf]
        %v345 = vld [vmem:[%s1 + $0x178] sm:$0xf]
        %v346 = vld [vmem:[%s1 + $0x17c] sm:$0xf]
        %v347 = vld [vmem:[%s1 + $0x180] sm:$0xf]
        %v348 = vld [vmem:[%s1 + $0x184] sm:$0xf]
        %v349 = vld [vmem:[%s1 + $0x188] sm:$0xf]
        %v350 = vld [vmem:[%s1 + $0x18c] sm:$0xf]
        %v351 = vld [vmem:[%s1 + $0x190] sm:$0xf]
        %v352 = vld [vmem:[%s1 + $0x194] sm:$0xf]
        %v353 = vld [vmem:[%s1 + $0x198] sm:$0xf]
        %v354 = vld [vmem:[%s1 + $0x19c] sm:$0xf]
        %v355 = vld [vmem:[%s1 + $0x1a0] sm:$0xf]
        %v356 = vld [vmem:[%s1 + $0x1a4] sm:$0xf]
        %v357 = vld [vmem:[%s1 + $0x1a8] sm:$0xf]
        %v358 = vld [vmem:[%s1 + $0x1ac] sm:$0xf]
        %v359 = vld [vmem:[%s1 + $0x1b0] sm:$0xf]
        %v360 = vld [vmem:[%s1 + $0x1b4] sm:$0xf]
        %v361 = vld [vmem:[%s1 + $0x1b8] sm:$0xf]
        %v362 = vld [vmem:[%s1 + $0x1bc] sm:$0xf]
        %v363 = vld [vmem:[%s1 + $0x1c0] sm:$0xf]
        %v364 = vld [vmem:[%s1 + $0x1c4] sm:$0xf]
        %v365 = vld [vmem:[%s1 + $0x1c8] sm:$0xf]
        %v366 = vld [vmem:[%s1 + $0x1cc] sm:$0xf]
        %v367 = vld [vmem:[%s1 + $0x1d0] sm:$0xf]
        %v368 = vld [vmem:[%s1 + $0x1d4] sm:$0xf]
        %v369 = vld [vmem:[%s1 + $0x1d8] sm:$0xf]
        %v370 = vld [vmem:[%s1 + $0x1dc] sm:$0xf]
        %v371 = vld [vmem:[%s1 + $0x1e0] sm:$0xf]
        %v372 = vld [vmem:[%s1 + $0x1e4] sm:$0xf]
        %v373 = vld [vmem:[%s1 + $0x1e8] sm:$0xf]
        %v374 = vld [vmem:[%s1 + $0x1ec] sm:$0xf]
        %v375 = vld [vmem:[%s1 + $0x1f0] sm:$0xf]
        %v376 = vld [vmem:[%s1 + $0x1f4] sm:$0xf]
        %v377 = vld [vmem:[%s1 + $0x1f8] sm:$0xf]
        %v378 = vld [vmem:[%s1 + $0x1fc] sm:$0xf]
        %v379 = vld [vmem:[%s1 + $0x200] sm:$0xf]
        %v380 = vld [vmem:[%s1 + $0x204] sm:$0xf]
        %v381 = vld [vmem:[%s1 + $0x208] sm:$0xf]
        %v382 = vld [vmem:[%s1 + $0x20c] sm:$0xf]
        %v383 = vld [vmem:[%s1 + $0x210] sm:$0xf]
        %v384 = vld [vmem:[%s1 + $0x214] sm:$0xf]
        %v385 = vld [vmem:[%s1 + $0x218] sm:$0xf]
        %v386 = vld [vmem:[%s1 + $0x21c] sm:$0xf]
        %v387 = vld [vmem:[%s1 + $0x220] sm:$0xf]
        %v388 = vld [vmem:[%s1 + $0x224] sm:$0xf]
        %v389 = vld [vmem:[%s1 + $0x228] sm:$0xf]
        %v390 = vld [vmem:[%s1 + $0x22c] sm:$0xf]
        %v391 = vld [vmem:[%s1 + $0x230] sm:$0xf]
        %v392 = vld [vmem:[%s1 + $0x234] sm:$0xf]
        %v393 = vld [vmem:[%s1 + $0x238] sm:$0xf]
        %v394 = vld [vmem:[%s1 + $0x23c] sm:$0xf]
        %v395 = vld [vmem:[%s1 + $0x240] sm:$0xf]
        %v396 = vld [vmem:[%s1 + $0x244] sm:$0xf]
        %v397 = vld [vmem:[%s1 + $0x248] sm:$0xf]
        %v398 = vld [vmem:[%s1 + $0x24c] sm:$0xf]
        %v399 = vld [vmem:[%s1 + $0x250] sm:$0xf]
        %v400 = vld [vmem:[%s1 + $0x254] sm:$0xf]
        %v401 = vld [vmem:[%s1 + $0x258] sm:$0xf]
        %v402 = vld [vmem:[%s1 + $0x25c] sm:$0xf]
        %v403 = vld [vmem:[%s1 + $0x260] sm:$0xf]
        %v404 = vld [vmem:[%s1 + $0x264] sm:$0xf]
        %v405 = vld [vmem:[%s1 + $0x268] sm:$0xf]
        %v406 = vld [vmem:[%s1 + $0x26c] sm:$0xf]
        %v407 = vld [vmem:[%s1 + $0x270] sm:$0xf]
        %v408 = vld [vmem:[%s1 + $0x274] sm:$0xf]
        %v409 = vld [vmem:[%s1 + $0x278] sm:$0xf]
        %v410 = vld [vmem:[%s1 + $0x27c] sm:$0xf]
        %v411 = vld [vmem:[%s1 + $0x280] sm:$0xf]
        %v412 = vld [vmem:[%s1 + $0x284] sm:$0xf]
        %v413 = vld [vmem:[%s1 + $0x288] sm:$0xf]
        %v414 = vld [vmem:[%s1 + $0x28c] sm:$0xf]
        %v415 = vld [vmem:[%s1 + $0x290] sm:$0xf]
        %v416 = vld [vmem:[%s1 + $0x294] sm:$0xf]
        %v417 = vld [vmem:[%s1 + $0x298] sm:$0xf]
        %v418 = vld [vmem:[%s1 + $0x29c] sm:$0xf]
        %v419 = vld [vmem:[%s1 + $0x2a0] sm:$0xf]
        %v420 = vld [vmem:[%s1 + $0x2a4] sm:$0xf]
        %v421 = vld [vmem:[%s1 + $0x2a8] sm:$0xf]
        %v422 = vld [vmem:[%s1 + $0x2ac] sm:$0xf]
        %v423 = vld [vmem:[%s1 + $0x2b0] sm:$0xf]
        %v424 = vld [vmem:[%s1 + $0x2b4] sm:$0xf]
        %v425 = vld [vmem:[%s1 + $0x2b8] sm:$0xf]
        %v426 = vld [vmem:[%s1 + $0x2bc] sm:$0xf]
        %v427 = vld [vmem:[%s1 + $0x2c0] sm:$0xf]
        %v428 = vld [vmem:[%s1 + $0x2c4] sm:$0xf]
        %v429 = vld [vmem:[%s1 + $0x2c8] sm:$0xf]
        %v430 = vld [vmem:[%s1 + $0x2cc] sm:$0xf]
        %v431 = vld [vmem:[%s1 + $0x2d0] sm:$0xf]
        %v432 = vld [vmem:[%s1 + $0x2d4] sm:$0xf]
        %v433 = vld [vmem:[%s1 + $0x2d8] sm:$0xf]
        %v434 = vld [vmem:[%s1 + $0x2dc] sm:$0xf]
        %v435 = vld [vmem:[%s1 + $0x2e0] sm:$0xf]
        %v436 = vld [vmem:[%s1 + $0x2e4] sm:$0xf]
        %v437 = vld [vmem:[%s1 + $0x2e8] sm:$0xf]
        %v438 = vld [vmem:[%s1 + $0x2ec] sm:$0xf]
        %v439 = vld [vmem:[%s1 + $0x2f0] sm:$0xf]
        %v440 = vld [vmem:[%s1 + $0x2f4] sm:$0xf]
        %v441 = vld [vmem:[%s1 + $0x2f8] sm:$0xf]
        %v442 = vld [vmem:[%s1 + $0x2fc] sm:$0xf]
        %v443 = vld [vmem:[%s1 + $0x300] sm:$0xf]
        %v444 = vld [vmem:[%s1 + $0x304] sm:$0xf]
        %v445 = vld [vmem:[%s1 + $0x308] sm:$0xf]
        %v446 = vld [vmem:[%s1 + $0x30c] sm:$0xf]
        %v447 = vld [vmem:[%s1 + $0x310] sm:$0xf]
        %v448 = vld [vmem:[%s1 + $0x314] sm:$0xf]
        %v449 = vld [vmem:[%s1 + $0x318] sm:$0xf]
        %v450 = vld [vmem:[%s1 + $0x31c] sm:$0xf]
        %v451 = vld [vmem:[%s1 + $0x320] sm:$0xf]
        %v452 = vld [vmem:[%s1 + $0x324] sm:$0xf]
        %v453 = vld [vmem:[%s1 + $0x328] sm:$0xf]
        %v454 = vld [vmem:[%s1 + $0x32c] sm:$0xf]
        %v455 = vld [vmem:[%s1 + $0x330] sm:$0xf]
        %v456 = vld [vmem:[%s1 + $0x334] sm:$0xf]
        %v457 = vld [vmem:[%s1 + $0x338] sm:$0xf]
        %v458 = vld [vmem:[%s1 + $0x33c] sm:$0xf]
        %v459 = vld [vmem:[%s1 + $0x340] sm:$0xf]
        %v460 = vld [vmem:[%s1 + $0x344] sm:$0xf]
        %v461 = vld [vmem:[%s1 + $0x348] sm:$0xf]
        %v462 = vld [vmem:[%s1 + $0x34c] sm:$0xf]
        %v463 = vld [vmem:[%s1 + $0x350] sm:$0xf]
        %v464 = vld [vmem:[%s1 + $0x354] sm:$0xf]
        %v465 = vld [vmem:[%s1 + $0x358] sm:$0xf]
        %v466 = vld [vmem:[%s1 + $0x35c] sm:$0xf]
        %v467 = vld [vmem:[%s1 + $0x360] sm:$0xf]
        %v468 = vld [vmem:[%s1 + $0x364] sm:$0xf]
        %v469 = vld [vmem:[%s1 + $0x368] sm:$0xf]
        %v470 = vld [vmem:[%s1 + $0x36c] sm:$0xf]
        %v471 = vld [vmem:[%s1 + $0x370] sm:$0xf]
        %v472 = vld [vmem:[%s1 + $0x374] sm:$0xf]
        %v473 = vld [vmem:[%s1 + $0x378] sm:$0xf]
        %v474 = vld [vmem:[%s1 + $0x37c] sm:$0xf]
        %v475 = vld [vmem:[%s1 + $0x380] sm:$0xf]
        %v476 = vld [vmem:[%s1 + $0x384] sm:$0xf]
        %v477 = vld [vmem:[%s1 + $0x388] sm:$0xf]
        %v478 = vld [vmem:[%s1 + $0x38c] sm:$0xf]
        %v479 = vld [vmem:[%s1 + $0x390] sm:$0xf]
        %v480 = vld [vmem:[%s1 + $0x394] sm:$0xf]
        %v481 = vld [vmem:[%s1 + $0x398] sm:$0xf]
        %v482 = vld [vmem:[%s1 + $0x39c] sm:$0xf]
        %v483 = vld [vmem:[%s1 + $0x3a0] sm:$0xf]
        %v484 = vld [vmem:[%s1 + $0x3a4] sm:$0xf]
        %v485 = vld [vmem:[%s1 + $0x3a8] sm:$0xf]
        %v486 = vld [vmem:[%s1 + $0x3ac] sm:$0xf]
        %v487 = vld [vmem:[%s1 + $0x3b0] sm:$0xf]
        %v488 = vld [vmem:[%s1 + $0x3b4] sm:$0xf]
        %v489 = vld [vmem:[%s1 + $0x3b8] sm:$0xf]
        %v490 = vld [vmem:[%s1 + $0x3bc] sm:$0xf]
        %v491 = vld [vmem:[%s1 + $0x3c0] sm:$0xf]
        %v492 = vld [vmem:[%s1 + $0x3c4] sm:$0xf]
        %v493 = vld [vmem:[%s1 + $0x3c8] sm:$0xf]
        %v494 = vld [vmem:[%s1 + $0x3cc] sm:$0xf]
        %v495 = vld [vmem:[%s1 + $0x3d0] sm:$0xf]
        %v496 = vld [vmem:[%s1 + $0x3d4] sm:$0xf]
        %v497 = vld [vmem:[%s1 + $0x3d8] sm:$0xf]
        %v498 = vld [vmem:[%s1 + $0x3dc] sm:$0xf]
        %v499 = vld [vmem:[%s1 + $0x3e0] sm:$0xf]
        %v500 = vld [vmem:[%s1 + $0x3e4] sm:$0xf]
        %v501 = vld [vmem:[%s1 + $0x3e8] sm:$0xf]
        %v502 = vld [vmem:[%s1 + $0x3ec] sm:$0xf]
        %v503 = vld [vmem:[%s1 + $0x3f0] sm:$0xf]
        %v504 = vld [vmem:[%s1 + $0x3f4] sm:$0xf]
        %v505 = vld [vmem:[%s1 + $0x3f8] sm:$0xf]
        %v506 = vld [vmem:[%s1 + $0x3fc] sm:$0xf]
        %v507 = vld [vmem:[%s1 + $0x400] sm:$0xf]
        %v508 = vld [vmem:[%s1 + $0x404] sm:$0xf]
        %v509 = vld [vmem:[%s1 + $0x408] sm:$0xf]
        %v510 = vld [vmem:[%s1 + $0x40c] sm:$0xf]
        %v511 = vld [vmem:[%s1 + $0x410] sm:$0xf]
        %v512 = vld [vmem:[%s1 + $0x414] sm:$0xf]
        %v513 = vld [vmem:[%s1 + $0x418] sm:$0xf]
        %v514 = vld [vmem:[%s1 + $0x41c] sm:$0xf]
        %v515 = vld [vmem:[%s1 + $0x420] sm:$0xf]
        %v516 = vld [vmem:[%s1 + $0x424] sm:$0xf]
        %v517 = vld [vmem:[%s1 + $0x428] sm:$0xf]
        %v518 = vld [vmem:[%s1 + $0x42c] sm:$0xf]
        %v519 = vld [vmem:[%s1 + $0x430] sm:$0xf]
        %v520 = vld [vmem:[%s1 + $0x434] sm:$0xf]
        %v521 = vld [vmem:[%s1 + $0x438] sm:$0xf]
        %v522 = vld [vmem:[%s1 + $0x43c] sm:$0xf]
        %v523 = vld [vmem:[%s1 + $0x440] sm:$0xf]
        %v524 = vld [vmem:[%s1 + $0x444] sm:$0xf]
        %v525 = vld [vmem:[%s1 + $0x448] sm:$0xf]
        %v526 = vld [vmem:[%s1 + $0x44c] sm:$0xf]
        %v527 = vld [vmem:[%s1 + $0x450] sm:$0xf]
        %v528 = vld [vmem:[%s1 + $0x454] sm:$0xf]
        %v529 = vld [vmem:[%s1 + $0x458] sm:$0xf]
        %v530 = vld [vmem:[%s1 + $0x45c] sm:$0xf]
        %v531 = vld [vmem:[%s1 + $0x460] sm:$0xf]
        %v532 = vld [vmem:[%s1 + $0x464] sm:$0xf]
        %v533 = vld [vmem:[%s1 + $0x468] sm:$0xf]
        %v534 = vld [vmem:[%s1 + $0x46c] sm:$0xf]
        %v535 = vld [vmem:[%s1 + $0x470] sm:$0xf]
        %v536 = vld [vmem:[%s1 + $0x474] sm:$0xf]
        %v537 = vld [vmem:[%s1 + $0x478] sm:$0xf]
        %v538 = vld [vmem:[%s1 + $0x47c] sm:$0xf]
        %v539 = vld [vmem:[%s1 + $0x480] sm:$0xf]
        %v540 = vld [vmem:[%s1 + $0x484] sm:$0xf]
        %v541 = vld [vmem:[%s1 + $0x488] sm:$0xf]
        %v542 = vld [vmem:[%s1 + $0x48c] sm:$0xf]
        %v543 = vld [vmem:[%s1 + $0x490] sm:$0xf]
        %v544 = vld [vmem:[%s1 + $0x494] sm:$0xf]
        %v545 = vld [vmem:[%s1 + $0x498] sm:$0xf]
        %v546 = vld [vmem:[%s1 + $0x49c] sm:$0xf]
        %v547 = vld [vmem:[%s1 + $0x4a0] sm:$0xf]
        %v548 = vld [vmem:[%s1 + $0x4a4] sm:$0xf]
        %v549 = vld [vmem:[%s1 + $0x4a8] sm:$0xf]
        %v550 = vld [vmem:[%s1 + $0x4ac] sm:$0xf]
        %v551 = vld [vmem:[%s1 + $0x4b0] sm:$0xf]
        %v552 = vld [vmem:[%s1 + $0x4b4] sm:$0xf]
        %v553 = vld [vmem:[%s1 + $0x4b8] sm:$0xf]
        %v554 = vld [vmem:[%s1 + $0x4bc] sm:$0xf]
        %v555 = vld [vmem:[%s1 + $0x4c0] sm:$0xf]
        %v556 = vld [vmem:[%s1 + $0x4c4] sm:$0xf]
        %v557 = vld [vmem:[%s1 + $0x4c8] sm:$0xf]
        %v558 = vld [vmem:[%s1 + $0x4cc] sm:$0xf]
        %v559 = vld [vmem:[%s1 + $0x4d0] sm:$0xf]
        %v560 = vld [vmem:[%s1 + $0x4d4] sm:$0xf]
        %v561 = vld [vmem:[%s1 + $0x4d8] sm:$0xf]
        %v562 = vld [vmem:[%s1 + $0x4dc] sm:$0xf]
        %v563 = vld [vmem:[%s1 + $0x4e0] sm:$0xf]
        %v564 = vld [vmem:[%s1 + $0x4e4] sm:$0xf]
        %v565 = vld [vmem:[%s1 + $0x4e8] sm:$0xf]
        %v566 = vld [vmem:[%s1 + $0x4ec] sm:$0xf]
        %v567 = vld [vmem:[%s1 + $0x4f0] sm:$0xf]
        %v568 = vld [vmem:[%s1 + $0x4f4] sm:$0xf]
        %v569 = vld [vmem:[%s1 + $0x4f8] sm:$0xf]
        %v570 = vld [vmem:[%s1 + $0x4fc] sm:$0xf]
        %v571 = vld [vmem:[%s1 + $0x500] sm:$0xf]
        %v572 = vld [vmem:[%s1 + $0x504] sm:$0xf]
        %v573 = vld [vmem:[%s1 + $0x508] sm:$0xf]
        %v574 = vld [vmem:[%s1 + $0x50c] sm:$0xf]
        %v575 = vld [vmem:[%s1 + $0x510] sm:$0xf]
        %v576 = vld [vmem:[%s1 + $0x514] sm:$0xf]
        %v577 = vld [vmem:[%s1 + $0x518] sm:$0xf]
        %v578 = vld [vmem:[%s1 + $0x51c] sm:$0xf]
        %v579 = vld [vmem:[%s1 + $0x520] sm:$0xf]
        %v580 = vld [vmem:[%s1 + $0x524] sm:$0xf]
        %v581 = vld [vmem:[%s1 + $0x528] sm:$0xf]
        %v582 = vld [vmem:[%s1 + $0x52c] sm:$0xf]
        %v583 = vld [vmem:[%s1 + $0x530] sm:$0xf]
        %v584 = vld [vmem:[%s1 + $0x534] sm:$0xf]
        %v585 = vld [vmem:[%s1 + $0x538] sm:$0xf]
        %v586 = vld [vmem:[%s1 + $0x53c] sm:$0xf]
        %v587 = vld [vmem:[%s1 + $0x540] sm:$0xf]
        %v588 = vld [vmem:[%s1 + $0x544] sm:$0xf]
        %v589 = vld [vmem:[%s1 + $0x548] sm:$0xf]
        %v590 = vld [vmem:[%s1 + $0x54c] sm:$0xf]
        %v591 = vld [vmem:[%s1 + $0x550] sm:$0xf]
        %v592 = vld [vmem:[%s1 + $0x554] sm:$0xf]
        %v593 = vld [vmem:[%s1 + $0x558] sm:$0xf]
        %v594 = vld [vmem:[%s1 + $0x55c] sm:$0xf]
        %v595 = vld [vmem:[%s1 + $0x560] sm:$0xf]
        %v596 = vld [vmem:[%s1 + $0x564] sm:$0xf]
        %v597 = vld [vmem:[%s1 + $0x568] sm:$0xf]
        %v598 = vld [vmem:[%s1 + $0x56c] sm:$0xf]
        %v599 = vld [vmem:[%s1 + $0x570] sm:$0xf]
        %v600 = vld [vmem:[%s1 + $0x574] sm:$0xf]
        %v601 = vld [vmem:[%s1 + $0x578] sm:$0xf]
        %v602 = vld [vmem:[%s1 + $0x57c] sm:$0xf]
        %v603 = vld [vmem:[%s1 + $0x580] sm:$0xf]
        %v604 = vld [vmem:[%s1 + $0x584] sm:$0xf]
        %v605 = vld [vmem:[%s1 + $0x588] sm:$0xf]
        %v606 = vld [vmem:[%s1 + $0x58c] sm:$0xf]
        %v607 = vld [vmem:[%s1 + $0x590] sm:$0xf]
        %v608 = vld [vmem:[%s1 + $0x594] sm:$0xf]
        %v609 = vld [vmem:[%s1 + $0x598] sm:$0xf]
        %v610 = vld [vmem:[%s1 + $0x59c] sm:$0xf]
        %v611 = vld [vmem:[%s1 + $0x5a0] sm:$0xf]
        %v612 = vld [vmem:[%s1 + $0x5a4] sm:$0xf]
        %v613 = vld [vmem:[%s1 + $0x5a8] sm:$0xf]
        %v614 = vld [vmem:[%s1 + $0x5ac] sm:$0xf]
        %v615 = vld [vmem:[%s1 + $0x5b0] sm:$0xf]
        %v616 = vld [vmem:[%s1 + $0x5b4] sm:$0xf]
        %v617 = vld [vmem:[%s1 + $0x5b8] sm:$0xf]
        %v618 = vld [vmem:[%s1 + $0x5bc] sm:$0xf]
        %v619 = vld [vmem:[%s1 + $0x5c0] sm:$0xf]
        %v620 = vld [vmem:[%s1 + $0x5c4] sm:$0xf]
        %v621 = vld [vmem:[%s1 + $0x5c8] sm:$0xf]
        %v622 = vld [vmem:[%s1 + $0x5cc] sm:$0xf]
        %v623 = vld [vmem:[%s1 + $0x5d0] sm:$0xf]
        %v624 = vld [vmem:[%s1 + $0x5d4] sm:$0xf]
        %v625 = vld [vmem:[%s1 + $0x5d8] sm:$0xf]
        %v626 = vld [vmem:[%s1 + $0x5dc] sm:$0xf]
        %v627 = vld [vmem:[%s1 + $0x5e0] sm:$0xf]
        %v628 = vld [vmem:[%s1 + $0x5e4] sm:$0xf]
        %v629 = vld [vmem:[%s1 + $0x5e8] sm:$0xf]
        %v630 = vld [vmem:[%s1 + $0x5ec] sm:$0xf]
        %v631 = vld [vmem:[%s1 + $0x5f0] sm:$0xf]
        %v632 = vld [vmem:[%s1 + $0x5f4] sm:$0xf]
        %v633 = vld [vmem:[%s1 + $0x5f8] sm:$0xf]
        %v634 = vld [vmem:[%s1 + $0x5fc] sm:$0xf]
        %v635 = vld [vmem:[%s1 + $0x600] sm:$0xf]
        %v636 = vld [vmem:[%s1 + $0x604] sm:$0xf]
        %v637 = vld [vmem:[%s1 + $0x608] sm:$0xf]
        %v638 = vld [vmem:[%s1 + $0x60c] sm:$0xf]
        %v639 = vld [vmem:[%s1 + $0x610] sm:$0xf]
        %v640 = vld [vmem:[%s1 + $0x614] sm:$0xf]
        %v641 = vld [vmem:[%s1 + $0x618] sm:$0xf]
        %v642 = vld [vmem:[%s1 + $0x61c] sm:$0xf]
        %v643 = vld [vmem:[%s2] sm:$0x1]
        %v645 = vlaneseq
        %v646 = vshrl.u32 %v645, 7
        %v647 = vsub.s32 0, %v646
        %v648 = vrot.slane %v643, %v647
        %v1042 = vunpack.c.l.b16 %v251
        %v1043 = vunpack.c.l.b16 %v252
        %v1044 = vunpack.c.l.b16 %v253
        %v1045 = vunpack.c.l.b16 %v254
        %v1046 = vunpack.c.l.b16 %v255
        %v1047 = vunpack.c.l.b16 %v256
        %v1048 = vunpack.c.l.b16 %v257
        %v1049 = vunpack.c.l.b16 %v258
        %v1050 = vunpack.c.l.b16 %v259
        %v1051 = vunpack.c.l.b16 %v260
        %v1052 = vunpack.c.l.b16 %v261
        %v1053 = vunpack.c.l.b16 %v262
        %v1054 = vunpack.c.l.b16 %v263
        %v1055 = vunpack.c.l.b16 %v264
        %v1056 = vunpack.c.l.b16 %v265
        %v1057 = vunpack.c.l.b16 %v266
        %v1058 = vunpack.c.l.b16 %v267
        %v1059 = vunpack.c.l.b16 %v268
        %v1060 = vunpack.c.l.b16 %v269
        %v1061 = vunpack.c.l.b16 %v270
        %v1062 = vunpack.c.l.b16 %v271
        %v1063 = vunpack.c.l.b16 %v272
        %v1064 = vunpack.c.l.b16 %v273
        %v1065 = vunpack.c.l.b16 %v274
        %v1066 = vunpack.c.l.b16 %v275
        %v1067 = vunpack.c.l.b16 %v276
        %v1068 = vunpack.c.l.b16 %v277
        %v1069 = vunpack.c.l.b16 %v278
        %v1070 = vunpack.c.l.b16 %v279
        %v1071 = vunpack.c.l.b16 %v280
        %v1072 = vunpack.c.l.b16 %v281
        %v1073 = vunpack.c.l.b16 %v282
        %v1074 = vunpack.c.l.b16 %v283
        %v1075 = vunpack.c.l.b16 %v284
        %v1076 = vunpack.c.l.b16 %v285
        %v1077 = vunpack.c.l.b16 %v286
        %v1078 = vunpack.c.l.b16 %v287
        %v1079 = vunpack.c.l.b16 %v288
        %v1080 = vunpack.c.l.b16 %v289
        %v1081 = vunpack.c.l.b16 %v290
        %v1082 = vunpack.c.l.b16 %v291
        %v1083 = vunpack.c.l.b16 %v292
        %v1084 = vunpack.c.l.b16 %v293
        %v1085 = vunpack.c.l.b16 %v294
        %v1086 = vunpack.c.l.b16 %v295
        %v1087 = vunpack.c.l.b16 %v296
        %v1088 = vunpack.c.l.b16 %v297
        %v1089 = vunpack.c.l.b16 %v298
        %v1090 = vunpack.c.l.b16 %v299
        %v1091 = vunpack.c.l.b16 %v300
        %v1092 = vunpack.c.l.b16 %v301
        %v1093 = vunpack.c.l.b16 %v302
        %v1094 = vunpack.c.l.b16 %v303
        %v1095 = vunpack.c.l.b16 %v304
        %v1096 = vunpack.c.l.b16 %v305
        %v1097 = vunpack.c.l.b16 %v306
        %v1098 = vunpack.c.l.b16 %v307
        %v1099 = vunpack.c.l.b16 %v308
        %v1100 = vunpack.c.l.b16 %v309
        %v1101 = vunpack.c.l.b16 %v310
        %v1102 = vunpack.c.l.b16 %v311
        %v1103 = vunpack.c.l.b16 %v312
        %v1104 = vunpack.c.l.b16 %v313
        %v1105 = vunpack.c.l.b16 %v314
        %v1106 = vunpack.c.l.b16 %v315
        %v1107 = vunpack.c.l.b16 %v316
        %v1108 = vunpack.c.l.b16 %v317
        %v1109 = vunpack.c.l.b16 %v318
        %v1110 = vunpack.c.l.b16 %v319
        %v1111 = vunpack.c.l.b16 %v320
        %v1112 = vunpack.c.l.b16 %v321
        %v1113 = vunpack.c.l.b16 %v322
        %v1114 = vunpack.c.l.b16 %v323
        %v1115 = vunpack.c.l.b16 %v324
        %v1116 = vunpack.c.l.b16 %v325
        %v1117 = vunpack.c.l.b16 %v326
        %v1118 = vunpack.c.l.b16 %v327
        %v1119 = vunpack.c.l.b16 %v328
        %v1120 = vunpack.c.l.b16 %v329
        %v1121 = vunpack.c.l.b16 %v330
        %v1122 = vunpack.c.l.b16 %v331
        %v1123 = vunpack.c.l.b16 %v332
        %v1124 = vunpack.c.l.b16 %v333
        %v1125 = vunpack.c.l.b16 %v334
        %v1126 = vunpack.c.l.b16 %v335
        %v1127 = vunpack.c.l.b16 %v336
        %v1128 = vunpack.c.l.b16 %v337
        %v1129 = vunpack.c.l.b16 %v338
        %v1130 = vunpack.c.l.b16 %v339
        %v1131 = vunpack.c.l.b16 %v340
        %v1132 = vunpack.c.l.b16 %v341
        %v1133 = vunpack.c.l.b16 %v342
        %v1134 = vunpack.c.l.b16 %v343
        %v1135 = vunpack.c.l.b16 %v344
        %v1136 = vunpack.c.l.b16 %v345
        %v1137 = vunpack.c.l.b16 %v346
        %v1138 = vunpack.c.l.b16 %v347
        %v1139 = vunpack.c.l.b16 %v348
        %v1140 = vunpack.c.l.b16 %v349
        %v1141 = vunpack.c.l.b16 %v350
        %v1142 = vunpack.c.l.b16 %v351
        %v1143 = vunpack.c.l.b16 %v352
        %v1144 = vunpack.c.l.b16 %v353
        %v1145 = vunpack.c.l.b16 %v354
        %v1146 = vunpack.c.l.b16 %v355
        %v1147 = vunpack.c.l.b16 %v356
        %v1148 = vunpack.c.l.b16 %v357
        %v1149 = vunpack.c.l.b16 %v358
        %v1150 = vunpack.c.l.b16 %v359
        %v1151 = vunpack.c.l.b16 %v360
        %v1152 = vunpack.c.l.b16 %v361
        %v1153 = vunpack.c.l.b16 %v362
        %v1154 = vunpack.c.l.b16 %v363
        %v1155 = vunpack.c.l.b16 %v364
        %v1156 = vunpack.c.l.b16 %v365
        %v1157 = vunpack.c.l.b16 %v366
        %v1158 = vunpack.c.l.b16 %v367
        %v1159 = vunpack.c.l.b16 %v368
        %v1160 = vunpack.c.l.b16 %v369
        %v1161 = vunpack.c.l.b16 %v370
        %v1162 = vunpack.c.l.b16 %v371
        %v1163 = vunpack.c.l.b16 %v372
        %v1164 = vunpack.c.l.b16 %v373
        %v1165 = vunpack.c.l.b16 %v374
        %v1166 = vunpack.c.l.b16 %v375
        %v1167 = vunpack.c.l.b16 %v376
        %v1168 = vunpack.c.l.b16 %v377
        %v1169 = vunpack.c.l.b16 %v378
        %v1170 = vunpack.c.l.b16 %v379
        %v1171 = vunpack.c.l.b16 %v380
        %v1172 = vunpack.c.l.b16 %v381
        %v1173 = vunpack.c.l.b16 %v382
        %v1174 = vunpack.c.l.b16 %v383
        %v1175 = vunpack.c.l.b16 %v384
        %v1176 = vunpack.c.l.b16 %v385
        %v1177 = vunpack.c.l.b16 %v386
        %v1178 = vunpack.c.l.b16 %v387
        %v1179 = vunpack.c.l.b16 %v388
        %v1180 = vunpack.c.l.b16 %v389
        %v1181 = vunpack.c.l.b16 %v390
        %v1182 = vunpack.c.l.b16 %v391
        %v1183 = vunpack.c.l.b16 %v392
        %v1184 = vunpack.c.l.b16 %v393
        %v1185 = vunpack.c.l.b16 %v394
        %v1186 = vunpack.c.l.b16 %v395
        %v1187 = vunpack.c.l.b16 %v396
        %v1188 = vunpack.c.l.b16 %v397
        %v1189 = vunpack.c.l.b16 %v398
        %v1190 = vunpack.c.l.b16 %v399
        %v1191 = vunpack.c.l.b16 %v400
        %v1192 = vunpack.c.l.b16 %v401
        %v1193 = vunpack.c.l.b16 %v402
        %v1194 = vunpack.c.l.b16 %v403
        %v1195 = vunpack.c.l.b16 %v404
        %v1196 = vunpack.c.l.b16 %v405
        %v1197 = vunpack.c.l.b16 %v406
        %v1198 = vunpack.c.l.b16 %v407
        %v1199 = vunpack.c.l.b16 %v408
        %v1200 = vunpack.c.l.b16 %v409
        %v1201 = vunpack.c.l.b16 %v410
        %v1202 = vunpack.c.l.b16 %v411
        %v1203 = vunpack.c.l.b16 %v412
        %v1204 = vunpack.c.l.b16 %v413
        %v1205 = vunpack.c.l.b16 %v414
        %v1206 = vunpack.c.l.b16 %v415
        %v1207 = vunpack.c.l.b16 %v416
        %v1208 = vunpack.c.l.b16 %v417
        %v1209 = vunpack.c.l.b16 %v418
        %v1210 = vunpack.c.l.b16 %v419
        %v1211 = vunpack.c.l.b16 %v420
        %v1212 = vunpack.c.l.b16 %v421
        %v1213 = vunpack.c.l.b16 %v422
        %v1214 = vunpack.c.l.b16 %v423
        %v1215 = vunpack.c.l.b16 %v424
        %v1216 = vunpack.c.l.b16 %v425
        %v1217 = vunpack.c.l.b16 %v426
        %v1218 = vunpack.c.l.b16 %v427
        %v1219 = vunpack.c.l.b16 %v428
        %v1220 = vunpack.c.l.b16 %v429
        %v1221 = vunpack.c.l.b16 %v430
        %v1222 = vunpack.c.l.b16 %v431
        %v1223 = vunpack.c.l.b16 %v432
        %v1224 = vunpack.c.l.b16 %v433
        %v1225 = vunpack.c.l.b16 %v434
        %v1226 = vunpack.c.l.b16 %v435
        %v1227 = vunpack.c.l.b16 %v436
        %v1228 = vunpack.c.l.b16 %v437
        %v1229 = vunpack.c.l.b16 %v438
        %v1230 = vunpack.c.l.b16 %v439
        %v1231 = vunpack.c.l.b16 %v440
        %v1232 = vunpack.c.l.b16 %v441
        %v1233 = vunpack.c.l.b16 %v442
        %v1234 = vunpack.c.l.b16 %v443
        %v1235 = vunpack.c.l.b16 %v444
        %v1236 = vunpack.c.l.b16 %v445
        %v1237 = vunpack.c.l.b16 %v446
        %v1238 = vunpack.c.l.b16 %v447
        %v1239 = vunpack.c.l.b16 %v448
        %v1240 = vunpack.c.l.b16 %v449
        %v1241 = vunpack.c.l.b16 %v450
        %v1242 = vunpack.c.l.b16 %v451
        %v1243 = vunpack.c.l.b16 %v452
        %v1244 = vunpack.c.l.b16 %v453
        %v1245 = vunpack.c.l.b16 %v454
        %v1246 = vunpack.c.l.b16 %v455
        %v1247 = vunpack.c.l.b16 %v456
        %v1248 = vunpack.c.l.b16 %v457
        %v1249 = vunpack.c.l.b16 %v458
        %v1250 = vunpack.c.l.b16 %v459
        %v1251 = vunpack.c.l.b16 %v460
        %v1252 = vunpack.c.l.b16 %v461
        %v1253 = vunpack.c.l.b16 %v462
        %v1254 = vunpack.c.l.b16 %v463
        %v1255 = vunpack.c.l.b16 %v464
        %v1256 = vunpack.c.l.b16 %v465
        %v1257 = vunpack.c.l.b16 %v466
        %v1258 = vunpack.c.l.b16 %v467
        %v1259 = vunpack.c.l.b16 %v468
        %v1260 = vunpack.c.l.b16 %v469
        %v1261 = vunpack.c.l.b16 %v470
        %v1262 = vunpack.c.l.b16 %v471
        %v1263 = vunpack.c.l.b16 %v472
        %v1264 = vunpack.c.l.b16 %v473
        %v1265 = vunpack.c.l.b16 %v474
        %v1266 = vunpack.c.l.b16 %v475
        %v1267 = vunpack.c.l.b16 %v476
        %v1268 = vunpack.c.l.b16 %v477
        %v1269 = vunpack.c.l.b16 %v478
        %v1270 = vunpack.c.l.b16 %v479
        %v1271 = vunpack.c.l.b16 %v480
        %v1272 = vunpack.c.l.b16 %v481
        %v1273 = vunpack.c.l.b16 %v482
        %v1274 = vunpack.c.l.b16 %v483
        %v1275 = vunpack.c.l.b16 %v484
        %v1276 = vunpack.c.l.b16 %v485
        %v1277 = vunpack.c.l.b16 %v486
        %v1278 = vunpack.c.l.b16 %v487
        %v1279 = vunpack.c.l.b16 %v488
        %v1280 = vunpack.c.l.b16 %v489
        %v1281 = vunpack.c.l.b16 %v490
        %v1282 = vunpack.c.l.b16 %v491
        %v1283 = vunpack.c.l.b16 %v492
        %v1284 = vunpack.c.l.b16 %v493
        %v1285 = vunpack.c.l.b16 %v494
        %v1286 = vunpack.c.l.b16 %v495
        %v1287 = vunpack.c.l.b16 %v496
        %v1288 = vunpack.c.l.b16 %v497
        %v1289 = vunpack.c.l.b16 %v498
        %v1290 = vunpack.c.l.b16 %v499
        %v1291 = vunpack.c.l.b16 %v500
        %v1292 = vunpack.c.l.b16 %v501
        %v1293 = vunpack.c.l.b16 %v502
        %v1294 = vunpack.c.l.b16 %v503
        %v1295 = vunpack.c.l.b16 %v504
        %v1296 = vunpack.c.l.b16 %v505
        %v1297 = vunpack.c.l.b16 %v506
        %v1298 = vunpack.c.l.b16 %v507
        %v1299 = vunpack.c.l.b16 %v508
        %v1300 = vunpack.c.l.b16 %v509
        %v1301 = vunpack.c.l.b16 %v510
        %v1302 = vunpack.c.l.b16 %v511
        %v1303 = vunpack.c.l.b16 %v512
        %v1304 = vunpack.c.l.b16 %v513
        %v1305 = vunpack.c.l.b16 %v514
        %v1306 = vunpack.c.l.b16 %v515
        %v1307 = vunpack.c.l.b16 %v516
        %v1308 = vunpack.c.l.b16 %v517
        %v1309 = vunpack.c.l.b16 %v518
        %v1310 = vunpack.c.l.b16 %v519
        %v1311 = vunpack.c.l.b16 %v520
        %v1312 = vunpack.c.l.b16 %v521
        %v1313 = vunpack.c.l.b16 %v522
        %v1314 = vunpack.c.l.b16 %v523
        %v1315 = vunpack.c.l.b16 %v524
        %v1316 = vunpack.c.l.b16 %v525
        %v1317 = vunpack.c.l.b16 %v526
        %v1318 = vunpack.c.l.b16 %v527
        %v1319 = vunpack.c.l.b16 %v528
        %v1320 = vunpack.c.l.b16 %v529
        %v1321 = vunpack.c.l.b16 %v530
        %v1322 = vunpack.c.l.b16 %v531
        %v1323 = vunpack.c.l.b16 %v532
        %v1324 = vunpack.c.l.b16 %v533
        %v1325 = vunpack.c.l.b16 %v534
        %v1326 = vunpack.c.l.b16 %v535
        %v1327 = vunpack.c.l.b16 %v536
        %v1328 = vunpack.c.l.b16 %v537
        %v1329 = vunpack.c.l.b16 %v538
        %v1330 = vunpack.c.l.b16 %v539
        %v1331 = vunpack.c.l.b16 %v540
        %v1332 = vunpack.c.l.b16 %v541
        %v1333 = vunpack.c.l.b16 %v542
        %v1334 = vunpack.c.l.b16 %v543
        %v1335 = vunpack.c.l.b16 %v544
        %v1336 = vunpack.c.l.b16 %v545
        %v1337 = vunpack.c.l.b16 %v546
        %v1338 = vunpack.c.l.b16 %v547
        %v1339 = vunpack.c.l.b16 %v548
        %v1340 = vunpack.c.l.b16 %v549
        %v1341 = vunpack.c.l.b16 %v550
        %v1342 = vunpack.c.l.b16 %v551
        %v1343 = vunpack.c.l.b16 %v552
        %v1344 = vunpack.c.l.b16 %v553
        %v1345 = vunpack.c.l.b16 %v554
        %v1346 = vunpack.c.l.b16 %v555
        %v1347 = vunpack.c.l.b16 %v556
        %v1348 = vunpack.c.l.b16 %v557
        %v1349 = vunpack.c.l.b16 %v558
        %v1350 = vunpack.c.l.b16 %v559
        %v1351 = vunpack.c.l.b16 %v560
        %v1352 = vunpack.c.l.b16 %v561
        %v1353 = vunpack.c.l.b16 %v562
        %v1354 = vunpack.c.l.b16 %v563
        %v1355 = vunpack.c.l.b16 %v564
        %v1356 = vunpack.c.l.b16 %v565
        %v1357 = vunpack.c.l.b16 %v566
        %v1358 = vunpack.c.l.b16 %v567
        %v1359 = vunpack.c.l.b16 %v568
        %v1360 = vunpack.c.l.b16 %v569
        %v1361 = vunpack.c.l.b16 %v570
        %v1362 = vunpack.c.l.b16 %v571
        %v1363 = vunpack.c.l.b16 %v572
        %v1364 = vunpack.c.l.b16 %v573
        %v1365 = vunpack.c.l.b16 %v574
        %v1366 = vunpack.c.l.b16 %v575
        %v1367 = vunpack.c.l.b16 %v576
        %v1368 = vunpack.c.l.b16 %v577
        %v1369 = vunpack.c.l.b16 %v578
        %v1370 = vunpack.c.l.b16 %v579
        %v1371 = vunpack.c.l.b16 %v580
        %v1372 = vunpack.c.l.b16 %v581
        %v1373 = vunpack.c.l.b16 %v582
        %v1374 = vunpack.c.l.b16 %v583
        %v1375 = vunpack.c.l.b16 %v584
        %v1376 = vunpack.c.l.b16 %v585
        %v1377 = vunpack.c.l.b16 %v586
        %v1378 = vunpack.c.l.b16 %v587
        %v1379 = vunpack.c.l.b16 %v588
        %v1380 = vunpack.c.l.b16 %v589
        %v1381 = vunpack.c.l.b16 %v590
        %v1382 = vunpack.c.l.b16 %v591
        %v1383 = vunpack.c.l.b16 %v592
        %v1384 = vunpack.c.l.b16 %v593
        %v1385 = vunpack.c.l.b16 %v594
        %v1386 = vunpack.c.l.b16 %v595
        %v1387 = vunpack.c.l.b16 %v596
        %v1388 = vunpack.c.l.b16 %v597
        %v1389 = vunpack.c.l.b16 %v598
        %v1390 = vunpack.c.l.b16 %v599
        %v1391 = vunpack.c.l.b16 %v600
        %v1392 = vunpack.c.l.b16 %v601
        %v1393 = vunpack.c.l.b16 %v602
        %v1394 = vunpack.c.l.b16 %v603
        %v1395 = vunpack.c.l.b16 %v604
        %v1396 = vunpack.c.l.b16 %v605
        %v1397 = vunpack.c.l.b16 %v606
        %v1398 = vunpack.c.l.b16 %v607
        %v1399 = vunpack.c.l.b16 %v608
        %v1400 = vunpack.c.l.b16 %v609
        %v1401 = vunpack.c.l.b16 %v610
        %v1402 = vunpack.c.l.b16 %v611
        %v1403 = vunpack.c.l.b16 %v612
        %v1404 = vunpack.c.l.b16 %v613
        %v1405 = vunpack.c.l.b16 %v614
        %v1406 = vunpack.c.l.b16 %v615
        %v1407 = vunpack.c.l.b16 %v616
        %v1408 = vunpack.c.l.b16 %v617
        %v1409 = vunpack.c.l.b16 %v618
        %v1410 = vunpack.c.l.b16 %v619
        %v1411 = vunpack.c.l.b16 %v620
        %v1412 = vunpack.c.l.b16 %v621
        %v1413 = vunpack.c.l.b16 %v622
        %v1414 = vunpack.c.l.b16 %v623
        %v1415 = vunpack.c.l.b16 %v624
        %v1416 = vunpack.c.l.b16 %v625
        %v1417 = vunpack.c.l.b16 %v626
        %v1418 = vunpack.c.l.b16 %v627
        %v1419 = vunpack.c.l.b16 %v628
        %v1420 = vunpack.c.l.b16 %v629
        %v1421 = vunpack.c.l.b16 %v630
        %v1422 = vunpack.c.l.b16 %v631
        %v1423 = vunpack.c.l.b16 %v632
        %v1424 = vunpack.c.l.b16 %v633
        %v1425 = vunpack.c.l.b16 %v634
        %v1426 = vunpack.c.l.b16 %v635
        %v1427 = vunpack.c.l.b16 %v636
        %v1428 = vunpack.c.l.b16 %v637
        %v1429 = vunpack.c.l.b16 %v638
        %v1430 = vunpack.c.l.b16 %v639
        %v1431 = vunpack.c.l.b16 %v640
        %v1432 = vunpack.c.l.b16 %v641
        %v1433 = vunpack.c.l.b16 %v642
        %v1434 = vpack.c.b16 %v1043, %v1042
        %v1435 = vpack.c.b16 %v1045, %v1044
        %v1436 = vpack.c.b16 %v1047, %v1046
        %v1437 = vpack.c.b16 %v1049, %v1048
        %v1438 = vpack.c.b16 %v1051, %v1050
        %v1439 = vpack.c.b16 %v1053, %v1052
        %v1440 = vpack.c.b16 %v1055, %v1054
        %v1441 = vpack.c.b16 %v1057, %v1056
        %v1442 = vpack.c.b16 %v1059, %v1058
        %v1443 = vpack.c.b16 %v1061, %v1060
        %v1444 = vpack.c.b16 %v1063, %v1062
        %v1445 = vpack.c.b16 %v1065, %v1064
        %v1446 = vpack.c.b16 %v1067, %v1066
        %v1447 = vpack.c.b16 %v1069, %v1068
        %v1448 = vpack.c.b16 %v1071, %v1070
        %v1449 = vpack.c.b16 %v1073, %v1072
        %v1450 = vpack.c.b16 %v1075, %v1074
        %v1451 = vpack.c.b16 %v1077, %v1076
        %v1452 = vpack.c.b16 %v1079, %v1078
        %v1453 = vpack.c.b16 %v1081, %v1080
        %v1454 = vpack.c.b16 %v1083, %v1082
        %v1455 = vpack.c.b16 %v1085, %v1084
        %v1456 = vpack.c.b16 %v1087, %v1086
        %v1457 = vpack.c.b16 %v1089, %v1088
        %v1458 = vpack.c.b16 %v1091, %v1090
        %v1459 = vpack.c.b16 %v1093, %v1092
        %v1460 = vpack.c.b16 %v1095, %v1094
        %v1461 = vpack.c.b16 %v1097, %v1096
        %v1462 = vpack.c.b16 %v1099, %v1098
        %v1463 = vpack.c.b16 %v1101, %v1100
        %v1464 = vpack.c.b16 %v1103, %v1102
        %v1465 = vpack.c.b16 %v1105, %v1104
        %v1466 = vpack.c.b16 %v1107, %v1106
        %v1467 = vpack.c.b16 %v1109, %v1108
        %v1468 = vpack.c.b16 %v1111, %v1110
        %v1469 = vpack.c.b16 %v1113, %v1112
        %v1470 = vpack.c.b16 %v1115, %v1114
        %v1471 = vpack.c.b16 %v1117, %v1116
        %v1472 = vpack.c.b16 %v1119, %v1118
        %v1473 = vpack.c.b16 %v1121, %v1120
        %v1474 = vpack.c.b16 %v1123, %v1122
        %v1475 = vpack.c.b16 %v1125, %v1124
        %v1476 = vpack.c.b16 %v1127, %v1126
        %v1477 = vpack.c.b16 %v1129, %v1128
        %v1478 = vpack.c.b16 %v1131, %v1130
        %v1479 = vpack.c.b16 %v1133, %v1132
        %v1480 = vpack.c.b16 %v1135, %v1134
        %v1481 = vpack.c.b16 %v1137, %v1136
        %v1482 = vpack.c.b16 %v1139, %v1138
        %v1483 = vpack.c.b16 %v1141, %v1140
        %v1484 = vpack.c.b16 %v1143, %v1142
        %v1485 = vpack.c.b16 %v1145, %v1144
        %v1486 = vpack.c.b16 %v1147, %v1146
        %v1487 = vpack.c.b16 %v1149, %v1148
        %v1488 = vpack.c.b16 %v1151, %v1150
        %v1489 = vpack.c.b16 %v1153, %v1152
        %v1490 = vpack.c.b16 %v1155, %v1154
        %v1491 = vpack.c.b16 %v1157, %v1156
        %v1492 = vpack.c.b16 %v1159, %v1158
        %v1493 = vpack.c.b16 %v1161, %v1160
        %v1494 = vpack.c.b16 %v1163, %v1162
        %v1495 = vpack.c.b16 %v1165, %v1164
        %v1496 = vpack.c.b16 %v1167, %v1166
        %v1497 = vpack.c.b16 %v1169, %v1168
        %v1498 = vpack.c.b16 %v1171, %v1170
        %v1499 = vpack.c.b16 %v1173, %v1172
        %v1500 = vpack.c.b16 %v1175, %v1174
        %v1501 = vpack.c.b16 %v1177, %v1176
        %v1502 = vpack.c.b16 %v1179, %v1178
        %v1503 = vpack.c.b16 %v1181, %v1180
        %v1504 = vpack.c.b16 %v1183, %v1182
        %v1505 = vpack.c.b16 %v1185, %v1184
        %v1506 = vpack.c.b16 %v1187, %v1186
        %v1507 = vpack.c.b16 %v1189, %v1188
        %v1508 = vpack.c.b16 %v1191, %v1190
        %v1509 = vpack.c.b16 %v1193, %v1192
        %v1510 = vpack.c.b16 %v1195, %v1194
        %v1511 = vpack.c.b16 %v1197, %v1196
        %v1512 = vpack.c.b16 %v1199, %v1198
        %v1513 = vpack.c.b16 %v1201, %v1200
        %v1514 = vpack.c.b16 %v1203, %v1202
        %v1515 = vpack.c.b16 %v1205, %v1204
        %v1516 = vpack.c.b16 %v1207, %v1206
        %v1517 = vpack.c.b16 %v1209, %v1208
        %v1518 = vpack.c.b16 %v1211, %v1210
        %v1519 = vpack.c.b16 %v1213, %v1212
        %v1520 = vpack.c.b16 %v1215, %v1214
        %v1521 = vpack.c.b16 %v1217, %v1216
        %v1522 = vpack.c.b16 %v1219, %v1218
        %v1523 = vpack.c.b16 %v1221, %v1220
        %v1524 = vpack.c.b16 %v1223, %v1222
        %v1525 = vpack.c.b16 %v1225, %v1224
        %v1526 = vpack.c.b16 %v1227, %v1226
        %v1527 = vpack.c.b16 %v1229, %v1228
        %v1528 = vpack.c.b16 %v1231, %v1230
        %v1529 = vpack.c.b16 %v1233, %v1232
        %v1530 = vpack.c.b16 %v1235, %v1234
        %v1531 = vpack.c.b16 %v1237, %v1236
        %v1532 = vpack.c.b16 %v1239, %v1238
        %v1533 = vpack.c.b16 %v1241, %v1240
        %v1534 = vpack.c.b16 %v1243, %v1242
        %v1535 = vpack.c.b16 %v1245, %v1244
        %v1536 = vpack.c.b16 %v1247, %v1246
        %v1537 = vpack.c.b16 %v1249, %v1248
        %v1538 = vpack.c.b16 %v1251, %v1250
        %v1539 = vpack.c.b16 %v1253, %v1252
        %v1540 = vpack.c.b16 %v1255, %v1254
        %v1541 = vpack.c.b16 %v1257, %v1256
        %v1542 = vpack.c.b16 %v1259, %v1258
        %v1543 = vpack.c.b16 %v1261, %v1260
        %v1544 = vpack.c.b16 %v1263, %v1262
        %v1545 = vpack.c.b16 %v1265, %v1264
        %v1546 = vpack.c.b16 %v1267, %v1266
        %v1547 = vpack.c.b16 %v1269, %v1268
        %v1548 = vpack.c.b16 %v1271, %v1270
        %v1549 = vpack.c.b16 %v1273, %v1272
        %v1550 = vpack.c.b16 %v1275, %v1274
        %v1551 = vpack.c.b16 %v1277, %v1276
        %v1552 = vpack.c.b16 %v1279, %v1278
        %v1553 = vpack.c.b16 %v1281, %v1280
        %v1554 = vpack.c.b16 %v1283, %v1282
        %v1555 = vpack.c.b16 %v1285, %v1284
        %v1556 = vpack.c.b16 %v1287, %v1286
        %v1557 = vpack.c.b16 %v1289, %v1288
        %v1558 = vpack.c.b16 %v1291, %v1290
        %v1559 = vpack.c.b16 %v1293, %v1292
        %v1560 = vpack.c.b16 %v1295, %v1294
        %v1561 = vpack.c.b16 %v1297, %v1296
        %v1562 = vpack.c.b16 %v1299, %v1298
        %v1563 = vpack.c.b16 %v1301, %v1300
        %v1564 = vpack.c.b16 %v1303, %v1302
        %v1565 = vpack.c.b16 %v1305, %v1304
        %v1566 = vpack.c.b16 %v1307, %v1306
        %v1567 = vpack.c.b16 %v1309, %v1308
        %v1568 = vpack.c.b16 %v1311, %v1310
        %v1569 = vpack.c.b16 %v1313, %v1312
        %v1570 = vpack.c.b16 %v1315, %v1314
        %v1571 = vpack.c.b16 %v1317, %v1316
        %v1572 = vpack.c.b16 %v1319, %v1318
        %v1573 = vpack.c.b16 %v1321, %v1320
        %v1574 = vpack.c.b16 %v1323, %v1322
        %v1575 = vpack.c.b16 %v1325, %v1324
        %v1576 = vpack.c.b16 %v1327, %v1326
        %v1577 = vpack.c.b16 %v1329, %v1328
        %v1578 = vpack.c.b16 %v1331, %v1330
        %v1579 = vpack.c.b16 %v1333, %v1332
        %v1580 = vpack.c.b16 %v1335, %v1334
        %v1581 = vpack.c.b16 %v1337, %v1336
        %v1582 = vpack.c.b16 %v1339, %v1338
        %v1583 = vpack.c.b16 %v1341, %v1340
        %v1584 = vpack.c.b16 %v1343, %v1342
        %v1585 = vpack.c.b16 %v1345, %v1344
        %v1586 = vpack.c.b16 %v1347, %v1346
        %v1587 = vpack.c.b16 %v1349, %v1348
        %v1588 = vpack.c.b16 %v1351, %v1350
        %v1589 = vpack.c.b16 %v1353, %v1352
        %v1590 = vpack.c.b16 %v1355, %v1354
        %v1591 = vpack.c.b16 %v1357, %v1356
        %v1592 = vpack.c.b16 %v1359, %v1358
        %v1593 = vpack.c.b16 %v1361, %v1360
        %v1594 = vpack.c.b16 %v1363, %v1362
        %v1595 = vpack.c.b16 %v1365, %v1364
        %v1596 = vpack.c.b16 %v1367, %v1366
        %v1597 = vpack.c.b16 %v1369, %v1368
        %v1598 = vpack.c.b16 %v1371, %v1370
        %v1599 = vpack.c.b16 %v1373, %v1372
        %v1600 = vpack.c.b16 %v1375, %v1374
        %v1601 = vpack.c.b16 %v1377, %v1376
        %v1602 = vpack.c.b16 %v1379, %v1378
        %v1603 = vpack.c.b16 %v1381, %v1380
        %v1604 = vpack.c.b16 %v1383, %v1382
        %v1605 = vpack.c.b16 %v1385, %v1384
        %v1606 = vpack.c.b16 %v1387, %v1386
        %v1607 = vpack.c.b16 %v1389, %v1388
        %v1608 = vpack.c.b16 %v1391, %v1390
        %v1609 = vpack.c.b16 %v1393, %v1392
        %v1610 = vpack.c.b16 %v1395, %v1394
        %v1611 = vpack.c.b16 %v1397, %v1396
        %v1612 = vpack.c.b16 %v1399, %v1398
        %v1613 = vpack.c.b16 %v1401, %v1400
        %v1614 = vpack.c.b16 %v1403, %v1402
        %v1615 = vpack.c.b16 %v1405, %v1404
        %v1616 = vpack.c.b16 %v1407, %v1406
        %v1617 = vpack.c.b16 %v1409, %v1408
        %v1618 = vpack.c.b16 %v1411, %v1410
        %v1619 = vpack.c.b16 %v1413, %v1412
        %v1620 = vpack.c.b16 %v1415, %v1414
        %v1621 = vpack.c.b16 %v1417, %v1416
        %v1622 = vpack.c.b16 %v1419, %v1418
        %v1623 = vpack.c.b16 %v1421, %v1420
        %v1624 = vpack.c.b16 %v1423, %v1422
        %v1625 = vpack.c.b16 %v1425, %v1424
        %v1626 = vpack.c.b16 %v1427, %v1426
        %v1627 = vpack.c.b16 %v1429, %v1428
        %v1628 = vpack.c.b16 %v1431, %v1430
        %v1629 = vpack.c.b16 %v1433, %v1432
        %vm1826 = vcmask 523264
        %v1828 = vsel %vm1826, %v250, 0
        %1830 = vmatprep.subr.bf16.mxu0 0
        %1831 = vmatpush1.bf16.msra.mxu0 %v1441
        %1832 = vmatprep.subr.bf16.mxu0 0
        %1833 = vmatpush1.bf16.msra.mxu0 %v1440
        %1834 = vmatprep.subr.bf16.mxu0 0
        %1835 = vmatpush1.bf16.msra.mxu0 %v1439
        %1836 = vmatprep.subr.bf16.mxu0 0
        %1837 = vmatpush1.bf16.msra.mxu0 %v1438
        %1838 = vmatprep.subr.bf16.mxu0 0
        %1839 = vmatpush1.bf16.msra.mxu0 %v1437
        %1840 = vmatprep.subr.bf16.mxu0 0
        %1841 = vmatpush1.bf16.msra.mxu0 %v1436
        %1842 = vmatprep.subr.bf16.mxu0 0
        %1843 = vmatpush1.bf16.msra.mxu0 %v1435
        %1844 = vmatprep.subr.bf16.mxu0 0
        %1845 = vmatpush1.bf16.msra.mxu0 %v1434
        %1846 = vmatprep.subr.bf16.mxu0 0
        %1847 = vmatpush2.bf16.msra.mxu0 %v1449
        %1848 = vmatprep.subr.bf16.mxu0 0
        %1849 = vmatpush2.bf16.msra.mxu0 %v1448
        %1850 = vmatprep.subr.bf16.mxu0 0
        %1851 = vmatpush2.bf16.msra.mxu0 %v1447
        %1852 = vmatprep.subr.bf16.mxu0 0
        %1853 = vmatpush2.bf16.msra.mxu0 %v1446
        %1854 = vmatprep.subr.bf16.mxu0 0
        %1855 = vmatpush2.bf16.msra.mxu0 %v1445
        %1856 = vmatprep.subr.bf16.mxu0 0
        %1857 = vmatpush2.bf16.msra.mxu0 %v1444
        %1858 = vmatprep.subr.bf16.mxu0 0
        %1859 = vmatpush2.bf16.msra.mxu0 %v1443
        %1860 = vmatprep.subr.bf16.mxu0 0
        %1861 = vmatpush2.bf16.msra.mxu0 %v1442
        %1862 = vmatprep.mubr.bf16.mxu0 %v227
        %1863 = vmatmul.mubr.bf16.gmra.mxu0 %v226
        %v1864 = vpop.f32.mrf.mxu0
        %v1865 = vadd.f32 %v648, %v1864
        %v1866 = vpop.f32.mrf.mxu0
        %v1867 = vpop.f32.mrf.mxu0
        %v1868 = vadd.f32 %v648, %v1867
        %v1869 = vpop.f32.mrf.mxu0
        %1870 = vdwg.mxu0
        %1871 = vmatprep.subr.bf16.mxu0 0
        %1872 = vmatpush1.bf16.msra.mxu0 %v1457
        %1873 = vmatprep.subr.bf16.mxu0 0
        %1874 = vmatpush1.bf16.msra.mxu0 %v1456
        %1875 = vmatprep.subr.bf16.mxu0 0
        %1876 = vmatpush1.bf16.msra.mxu0 %v1455
        %1877 = vmatprep.subr.bf16.mxu0 0
        %1878 = vmatpush1.bf16.msra.mxu0 %v1454
        %1879 = vmatprep.subr.bf16.mxu0 0
        %1880 = vmatpush1.bf16.msra.mxu0 %v1453
        %1881 = vmatprep.subr.bf16.mxu0 0
        %1882 = vmatpush1.bf16.msra.mxu0 %v1452
        %1883 = vmatprep.subr.bf16.mxu0 0
        %1884 = vmatpush1.bf16.msra.mxu0 %v1451
        %1885 = vmatprep.subr.bf16.mxu0 0
        %1886 = vmatpush1.bf16.msra.mxu0 %v1450
        %1887 = vmatprep.subr.bf16.mxu0 0
        %1888 = vmatpush2.bf16.msra.mxu0 %v1465
        %1889 = vmatprep.subr.bf16.mxu0 0
        %1890 = vmatpush2.bf16.msra.mxu0 %v1464
        %1891 = vmatprep.subr.bf16.mxu0 0
        %1892 = vmatpush2.bf16.msra.mxu0 %v1463
        %1893 = vmatprep.subr.bf16.mxu0 0
        %1894 = vmatpush2.bf16.msra.mxu0 %v1462
        %1895 = vmatprep.subr.bf16.mxu0 0
        %1896 = vmatpush2.bf16.msra.mxu0 %v1461
        %1897 = vmatprep.subr.bf16.mxu0 0
        %1898 = vmatpush2.bf16.msra.mxu0 %v1460
        %1899 = vmatprep.subr.bf16.mxu0 0
        %1900 = vmatpush2.bf16.msra.mxu0 %v1459
        %1901 = vmatprep.subr.bf16.mxu0 0
        %1902 = vmatpush2.bf16.msra.mxu0 %v1458
        %1903 = vmatprep.mubr.bf16.mxu0 %v229
        %1904 = vmatmul.mubr.bf16.gmra.mxu0 %v228
        %v1905 = vpop.f32.mrf.mxu0
        %v1906 = vadd.f32 %v1865, %v1905
        %v1907 = vpop.f32.mrf.mxu0
        %v1908 = vpop.f32.mrf.mxu0
        %v1909 = vadd.f32 %v1868, %v1908
        %v1910 = vpop.f32.mrf.mxu0
        %1911 = vdwg.mxu0
        %1912 = vmatprep.subr.bf16.mxu0 0
        %1913 = vmatpush1.bf16.msra.mxu0 %v1473
        %1914 = vmatprep.subr.bf16.mxu0 0
        %1915 = vmatpush1.bf16.msra.mxu0 %v1472
        %1916 = vmatprep.subr.bf16.mxu0 0
        %1917 = vmatpush1.bf16.msra.mxu0 %v1471
        %1918 = vmatprep.subr.bf16.mxu0 0
        %1919 = vmatpush1.bf16.msra.mxu0 %v1470
        %1920 = vmatprep.subr.bf16.mxu0 0
        %1921 = vmatpush1.bf16.msra.mxu0 %v1469
        %1922 = vmatprep.subr.bf16.mxu0 0
        %1923 = vmatpush1.bf16.msra.mxu0 %v1468
        %1924 = vmatprep.subr.bf16.mxu0 0
        %1925 = vmatpush1.bf16.msra.mxu0 %v1467
        %1926 = vmatprep.subr.bf16.mxu0 0
        %1927 = vmatpush1.bf16.msra.mxu0 %v1466
        %1928 = vmatprep.subr.bf16.mxu0 0
        %1929 = vmatpush2.bf16.msra.mxu0 %v1481
        %1930 = vmatprep.subr.bf16.mxu0 0
        %1931 = vmatpush2.bf16.msra.mxu0 %v1480
        %1932 = vmatprep.subr.bf16.mxu0 0
        %1933 = vmatpush2.bf16.msra.mxu0 %v1479
        %1934 = vmatprep.subr.bf16.mxu0 0
        %1935 = vmatpush2.bf16.msra.mxu0 %v1478
        %1936 = vmatprep.subr.bf16.mxu0 0
        %1937 = vmatpush2.bf16.msra.mxu0 %v1477
        %1938 = vmatprep.subr.bf16.mxu0 0
        %1939 = vmatpush2.bf16.msra.mxu0 %v1476
        %1940 = vmatprep.subr.bf16.mxu0 0
        %1941 = vmatpush2.bf16.msra.mxu0 %v1475
        %1942 = vmatprep.subr.bf16.mxu0 0
        %1943 = vmatpush2.bf16.msra.mxu0 %v1474
        %1944 = vmatprep.mubr.bf16.mxu0 %v231
        %1945 = vmatmul.mubr.bf16.gmra.mxu0 %v230
        %v1946 = vpop.f32.mrf.mxu0
        %v1947 = vadd.f32 %v1906, %v1946
        %v1948 = vpop.f32.mrf.mxu0
        %v1949 = vpop.f32.mrf.mxu0
        %v1950 = vadd.f32 %v1909, %v1949
        %v1951 = vpop.f32.mrf.mxu0
        %1952 = vdwg.mxu0
        %1953 = vmatprep.subr.bf16.mxu0 0
        %1954 = vmatpush1.bf16.msra.mxu0 %v1489
        %1955 = vmatprep.subr.bf16.mxu0 0
        %1956 = vmatpush1.bf16.msra.mxu0 %v1488
        %1957 = vmatprep.subr.bf16.mxu0 0
        %1958 = vmatpush1.bf16.msra.mxu0 %v1487
        %1959 = vmatprep.subr.bf16.mxu0 0
        %1960 = vmatpush1.bf16.msra.mxu0 %v1486
        %1961 = vmatprep.subr.bf16.mxu0 0
        %1962 = vmatpush1.bf16.msra.mxu0 %v1485
        %1963 = vmatprep.subr.bf16.mxu0 0
        %1964 = vmatpush1.bf16.msra.mxu0 %v1484
        %1965 = vmatprep.subr.bf16.mxu0 0
        %1966 = vmatpush1.bf16.msra.mxu0 %v1483
        %1967 = vmatprep.subr.bf16.mxu0 0
        %1968 = vmatpush1.bf16.msra.mxu0 %v1482
        %1969 = vmatprep.subr.bf16.mxu0 0
        %1970 = vmatpush2.bf16.msra.mxu0 %v1497
        %1971 = vmatprep.subr.bf16.mxu0 0
        %1972 = vmatpush2.bf16.msra.mxu0 %v1496
        %1973 = vmatprep.subr.bf16.mxu0 0
        %1974 = vmatpush2.bf16.msra.mxu0 %v1495
        %1975 = vmatprep.subr.bf16.mxu0 0
        %1976 = vmatpush2.bf16.msra.mxu0 %v1494
        %1977 = vmatprep.subr.bf16.mxu0 0
        %1978 = vmatpush2.bf16.msra.mxu0 %v1493
        %1979 = vmatprep.subr.bf16.mxu0 0
        %1980 = vmatpush2.bf16.msra.mxu0 %v1492
        %1981 = vmatprep.subr.bf16.mxu0 0
        %1982 = vmatpush2.bf16.msra.mxu0 %v1491
        %1983 = vmatprep.subr.bf16.mxu0 0
        %1984 = vmatpush2.bf16.msra.mxu0 %v1490
        %1985 = vmatprep.mubr.bf16.mxu0 %v233
        %1986 = vmatmul.mubr.bf16.gmra.mxu0 %v232
        %v1987 = vpop.f32.mrf.mxu0
        %v1988 = vadd.f32 %v1947, %v1987
        %v1989 = vpop.f32.mrf.mxu0
        %v1990 = vpop.f32.mrf.mxu0
        %v1991 = vadd.f32 %v1950, %v1990
        %v1992 = vpop.f32.mrf.mxu0
        %1993 = vdwg.mxu0
        %1994 = vmatprep.subr.bf16.mxu0 0
        %1995 = vmatpush1.bf16.msra.mxu0 %v1505
        %1996 = vmatprep.subr.bf16.mxu0 0
        %1997 = vmatpush1.bf16.msra.mxu0 %v1504
        %1998 = vmatprep.subr.bf16.mxu0 0
        %1999 = vmatpush1.bf16.msra.mxu0 %v1503
        %2000 = vmatprep.subr.bf16.mxu0 0
        %2001 = vmatpush1.bf16.msra.mxu0 %v1502
        %2002 = vmatprep.subr.bf16.mxu0 0
        %2003 = vmatpush1.bf16.msra.mxu0 %v1501
        %2004 = vmatprep.subr.bf16.mxu0 0
        %2005 = vmatpush1.bf16.msra.mxu0 %v1500
        %2006 = vmatprep.subr.bf16.mxu0 0
        %2007 = vmatpush1.bf16.msra.mxu0 %v1499
        %2008 = vmatprep.subr.bf16.mxu0 0
        %2009 = vmatpush1.bf16.msra.mxu0 %v1498
        %2010 = vmatprep.subr.bf16.mxu0 0
        %2011 = vmatpush2.bf16.msra.mxu0 %v1513
        %2012 = vmatprep.subr.bf16.mxu0 0
        %2013 = vmatpush2.bf16.msra.mxu0 %v1512
        %2014 = vmatprep.subr.bf16.mxu0 0
        %2015 = vmatpush2.bf16.msra.mxu0 %v1511
        %2016 = vmatprep.subr.bf16.mxu0 0
        %2017 = vmatpush2.bf16.msra.mxu0 %v1510
        %2018 = vmatprep.subr.bf16.mxu0 0
        %2019 = vmatpush2.bf16.msra.mxu0 %v1509
        %2020 = vmatprep.subr.bf16.mxu0 0
        %2021 = vmatpush2.bf16.msra.mxu0 %v1508
        %2022 = vmatprep.subr.bf16.mxu0 0
        %2023 = vmatpush2.bf16.msra.mxu0 %v1507
        %2024 = vmatprep.subr.bf16.mxu0 0
        %2025 = vmatpush2.bf16.msra.mxu0 %v1506
        %2026 = vmatprep.mubr.bf16.mxu0 %v235
        %2027 = vmatmul.mubr.bf16.gmra.mxu0 %v234
        %v2028 = vpop.f32.mrf.mxu0
        %v2029 = vadd.f32 %v1988, %v2028
        %v2030 = vpop.f32.mrf.mxu0
        %v2031 = vpop.f32.mrf.mxu0
        %v2032 = vadd.f32 %v1991, %v2031
        %v2033 = vpop.f32.mrf.mxu0
        %2034 = vdwg.mxu0
        %2035 = vmatprep.subr.bf16.mxu0 0
        %2036 = vmatpush1.bf16.msra.mxu0 %v1521
        %2037 = vmatprep.subr.bf16.mxu0 0
        %2038 = vmatpush1.bf16.msra.mxu0 %v1520
        %2039 = vmatprep.subr.bf16.mxu0 0
        %2040 = vmatpush1.bf16.msra.mxu0 %v1519
        %2041 = vmatprep.subr.bf16.mxu0 0
        %2042 = vmatpush1.bf16.msra.mxu0 %v1518
        %2043 = vmatprep.subr.bf16.mxu0 0
        %2044 = vmatpush1.bf16.msra.mxu0 %v1517
        %2045 = vmatprep.subr.bf16.mxu0 0
        %2046 = vmatpush1.bf16.msra.mxu0 %v1516
        %2047 = vmatprep.subr.bf16.mxu0 0
        %2048 = vmatpush1.bf16.msra.mxu0 %v1515
        %2049 = vmatprep.subr.bf16.mxu0 0
        %2050 = vmatpush1.bf16.msra.mxu0 %v1514
        %2051 = vmatprep.subr.bf16.mxu0 0
        %2052 = vmatpush2.bf16.msra.mxu0 %v1529
        %2053 = vmatprep.subr.bf16.mxu0 0
        %2054 = vmatpush2.bf16.msra.mxu0 %v1528
        %2055 = vmatprep.subr.bf16.mxu0 0
        %2056 = vmatpush2.bf16.msra.mxu0 %v1527
        %2057 = vmatprep.subr.bf16.mxu0 0
        %2058 = vmatpush2.bf16.msra.mxu0 %v1526
        %2059 = vmatprep.subr.bf16.mxu0 0
        %2060 = vmatpush2.bf16.msra.mxu0 %v1525
        %2061 = vmatprep.subr.bf16.mxu0 0
        %2062 = vmatpush2.bf16.msra.mxu0 %v1524
        %2063 = vmatprep.subr.bf16.mxu0 0
        %2064 = vmatpush2.bf16.msra.mxu0 %v1523
        %2065 = vmatprep.subr.bf16.mxu0 0
        %2066 = vmatpush2.bf16.msra.mxu0 %v1522
        %2067 = vmatprep.mubr.bf16.mxu0 %v237
        %2068 = vmatmul.mubr.bf16.gmra.mxu0 %v236
        %v2069 = vpop.f32.mrf.mxu0
        %v2070 = vadd.f32 %v2029, %v2069
        %v2071 = vpop.f32.mrf.mxu0
        %v2072 = vpop.f32.mrf.mxu0
        %v2073 = vadd.f32 %v2032, %v2072
        %v2074 = vpop.f32.mrf.mxu0
        %2075 = vdwg.mxu0
        %2076 = vmatprep.subr.bf16.mxu0 0
        %2077 = vmatpush1.bf16.msra.mxu0 %v1537
        %2078 = vmatprep.subr.bf16.mxu0 0
        %2079 = vmatpush1.bf16.msra.mxu0 %v1536
        %2080 = vmatprep.subr.bf16.mxu0 0
        %2081 = vmatpush1.bf16.msra.mxu0 %v1535
        %2082 = vmatprep.subr.bf16.mxu0 0
        %2083 = vmatpush1.bf16.msra.mxu0 %v1534
        %2084 = vmatprep.subr.bf16.mxu0 0
        %2085 = vmatpush1.bf16.msra.mxu0 %v1533
        %2086 = vmatprep.subr.bf16.mxu0 0
        %2087 = vmatpush1.bf16.msra.mxu0 %v1532
        %2088 = vmatprep.subr.bf16.mxu0 0
        %2089 = vmatpush1.bf16.msra.mxu0 %v1531
        %2090 = vmatprep.subr.bf16.mxu0 0
        %2091 = vmatpush1.bf16.msra.mxu0 %v1530
        %2092 = vmatprep.subr.bf16.mxu0 0
        %2093 = vmatpush2.bf16.msra.mxu0 %v1545
        %2094 = vmatprep.subr.bf16.mxu0 0
        %2095 = vmatpush2.bf16.msra.mxu0 %v1544
        %2096 = vmatprep.subr.bf16.mxu0 0
        %2097 = vmatpush2.bf16.msra.mxu0 %v1543
        %2098 = vmatprep.subr.bf16.mxu0 0
        %2099 = vmatpush2.bf16.msra.mxu0 %v1542
        %2100 = vmatprep.subr.bf16.mxu0 0
        %2101 = vmatpush2.bf16.msra.mxu0 %v1541
        %2102 = vmatprep.subr.bf16.mxu0 0
        %2103 = vmatpush2.bf16.msra.mxu0 %v1540
        %2104 = vmatprep.subr.bf16.mxu0 0
        %2105 = vmatpush2.bf16.msra.mxu0 %v1539
        %2106 = vmatprep.subr.bf16.mxu0 0
        %2107 = vmatpush2.bf16.msra.mxu0 %v1538
        %2108 = vmatprep.mubr.bf16.mxu0 %v239
        %2109 = vmatmul.mubr.bf16.gmra.mxu0 %v238
        %v2110 = vpop.f32.mrf.mxu0
        %v2111 = vadd.f32 %v2070, %v2110
        %v2112 = vpop.f32.mrf.mxu0
        %v2113 = vpop.f32.mrf.mxu0
        %v2114 = vadd.f32 %v2073, %v2113
        %v2115 = vpop.f32.mrf.mxu0
        %2116 = vdwg.mxu0
        %2117 = vmatprep.subr.bf16.mxu0 0
        %2118 = vmatpush1.bf16.msra.mxu0 %v1553
        %2119 = vmatprep.subr.bf16.mxu0 0
        %2120 = vmatpush1.bf16.msra.mxu0 %v1552
        %2121 = vmatprep.subr.bf16.mxu0 0
        %2122 = vmatpush1.bf16.msra.mxu0 %v1551
        %2123 = vmatprep.subr.bf16.mxu0 0
        %2124 = vmatpush1.bf16.msra.mxu0 %v1550
        %2125 = vmatprep.subr.bf16.mxu0 0
        %2126 = vmatpush1.bf16.msra.mxu0 %v1549
        %2127 = vmatprep.subr.bf16.mxu0 0
        %2128 = vmatpush1.bf16.msra.mxu0 %v1548
        %2129 = vmatprep.subr.bf16.mxu0 0
        %2130 = vmatpush1.bf16.msra.mxu0 %v1547
        %2131 = vmatprep.subr.bf16.mxu0 0
        %2132 = vmatpush1.bf16.msra.mxu0 %v1546
        %2133 = vmatprep.subr.bf16.mxu0 0
        %2134 = vmatpush2.bf16.msra.mxu0 %v1561
        %2135 = vmatprep.subr.bf16.mxu0 0
        %2136 = vmatpush2.bf16.msra.mxu0 %v1560
        %2137 = vmatprep.subr.bf16.mxu0 0
        %2138 = vmatpush2.bf16.msra.mxu0 %v1559
        %2139 = vmatprep.subr.bf16.mxu0 0
        %2140 = vmatpush2.bf16.msra.mxu0 %v1558
        %2141 = vmatprep.subr.bf16.mxu0 0
        %2142 = vmatpush2.bf16.msra.mxu0 %v1557
        %2143 = vmatprep.subr.bf16.mxu0 0
        %2144 = vmatpush2.bf16.msra.mxu0 %v1556
        %2145 = vmatprep.subr.bf16.mxu0 0
        %2146 = vmatpush2.bf16.msra.mxu0 %v1555
        %2147 = vmatprep.subr.bf16.mxu0 0
        %2148 = vmatpush2.bf16.msra.mxu0 %v1554
        %2149 = vmatprep.mubr.bf16.mxu0 %v241
        %2150 = vmatmul.mubr.bf16.gmra.mxu0 %v240
        %v2151 = vpop.f32.mrf.mxu0
        %v2152 = vadd.f32 %v2111, %v2151
        %v2153 = vpop.f32.mrf.mxu0
        %v2154 = vpop.f32.mrf.mxu0
        %v2155 = vadd.f32 %v2114, %v2154
        %v2156 = vpop.f32.mrf.mxu0
        %2157 = vdwg.mxu0
        %2158 = vmatprep.subr.bf16.mxu0 0
        %2159 = vmatpush1.bf16.msra.mxu0 %v1569
        %2160 = vmatprep.subr.bf16.mxu0 0
        %2161 = vmatpush1.bf16.msra.mxu0 %v1568
        %2162 = vmatprep.subr.bf16.mxu0 0
        %2163 = vmatpush1.bf16.msra.mxu0 %v1567
        %2164 = vmatprep.subr.bf16.mxu0 0
        %2165 = vmatpush1.bf16.msra.mxu0 %v1566
        %2166 = vmatprep.subr.bf16.mxu0 0
        %2167 = vmatpush1.bf16.msra.mxu0 %v1565
        %2168 = vmatprep.subr.bf16.mxu0 0
        %2169 = vmatpush1.bf16.msra.mxu0 %v1564
        %2170 = vmatprep.subr.bf16.mxu0 0
        %2171 = vmatpush1.bf16.msra.mxu0 %v1563
        %2172 = vmatprep.subr.bf16.mxu0 0
        %2173 = vmatpush1.bf16.msra.mxu0 %v1562
        %2174 = vmatprep.subr.bf16.mxu0 0
        %2175 = vmatpush2.bf16.msra.mxu0 %v1577
        %2176 = vmatprep.subr.bf16.mxu0 0
        %2177 = vmatpush2.bf16.msra.mxu0 %v1576
        %2178 = vmatprep.subr.bf16.mxu0 0
        %2179 = vmatpush2.bf16.msra.mxu0 %v1575
        %2180 = vmatprep.subr.bf16.mxu0 0
        %2181 = vmatpush2.bf16.msra.mxu0 %v1574
        %2182 = vmatprep.subr.bf16.mxu0 0
        %2183 = vmatpush2.bf16.msra.mxu0 %v1573
        %2184 = vmatprep.subr.bf16.mxu0 0
        %2185 = vmatpush2.bf16.msra.mxu0 %v1572
        %2186 = vmatprep.subr.bf16.mxu0 0
        %2187 = vmatpush2.bf16.msra.mxu0 %v1571
        %2188 = vmatprep.subr.bf16.mxu0 0
        %2189 = vmatpush2.bf16.msra.mxu0 %v1570
        %2190 = vmatprep.mubr.bf16.mxu0 %v243
        %2191 = vmatmul.mubr.bf16.gmra.mxu0 %v242
        %v2192 = vpop.f32.mrf.mxu0
        %v2193 = vadd.f32 %v2152, %v2192
        %v2194 = vpop.f32.mrf.mxu0
        %v2195 = vpop.f32.mrf.mxu0
        %v2196 = vadd.f32 %v2155, %v2195
        %v2197 = vpop.f32.mrf.mxu0
        %2198 = vdwg.mxu0
        %2199 = vmatprep.subr.bf16.mxu0 0
        %2200 = vmatpush1.bf16.msra.mxu0 %v1585
        %2201 = vmatprep.subr.bf16.mxu0 0
        %2202 = vmatpush1.bf16.msra.mxu0 %v1584
        %2203 = vmatprep.subr.bf16.mxu0 0
        %2204 = vmatpush1.bf16.msra.mxu0 %v1583
        %2205 = vmatprep.subr.bf16.mxu0 0
        %2206 = vmatpush1.bf16.msra.mxu0 %v1582
        %2207 = vmatprep.subr.bf16.mxu0 0
        %2208 = vmatpush1.bf16.msra.mxu0 %v1581
        %2209 = vmatprep.subr.bf16.mxu0 0
        %2210 = vmatpush1.bf16.msra.mxu0 %v1580
        %2211 = vmatprep.subr.bf16.mxu0 0
        %2212 = vmatpush1.bf16.msra.mxu0 %v1579
        %2213 = vmatprep.subr.bf16.mxu0 0
        %2214 = vmatpush1.bf16.msra.mxu0 %v1578
        %2215 = vmatprep.subr.bf16.mxu0 0
        %2216 = vmatpush2.bf16.msra.mxu0 %v1593
        %2217 = vmatprep.subr.bf16.mxu0 0
        %2218 = vmatpush2.bf16.msra.mxu0 %v1592
        %2219 = vmatprep.subr.bf16.mxu0 0
        %2220 = vmatpush2.bf16.msra.mxu0 %v1591
        %2221 = vmatprep.subr.bf16.mxu0 0
        %2222 = vmatpush2.bf16.msra.mxu0 %v1590
        %2223 = vmatprep.subr.bf16.mxu0 0
        %2224 = vmatpush2.bf16.msra.mxu0 %v1589
        %2225 = vmatprep.subr.bf16.mxu0 0
        %2226 = vmatpush2.bf16.msra.mxu0 %v1588
        %2227 = vmatprep.subr.bf16.mxu0 0
        %2228 = vmatpush2.bf16.msra.mxu0 %v1587
        %2229 = vmatprep.subr.bf16.mxu0 0
        %2230 = vmatpush2.bf16.msra.mxu0 %v1586
        %2231 = vmatprep.mubr.bf16.mxu0 %v245
        %2232 = vmatmul.mubr.bf16.gmra.mxu0 %v244
        %v2233 = vpop.f32.mrf.mxu0
        %v2234 = vadd.f32 %v2193, %v2233
        %v2235 = vpop.f32.mrf.mxu0
        %v2236 = vpop.f32.mrf.mxu0
        %v2237 = vadd.f32 %v2196, %v2236
        %v2238 = vpop.f32.mrf.mxu0
        %2239 = vdwg.mxu0
        %2240 = vmatprep.subr.bf16.mxu0 0
        %2241 = vmatpush1.bf16.msra.mxu0 %v1601
        %2242 = vmatprep.subr.bf16.mxu0 0
        %2243 = vmatpush1.bf16.msra.mxu0 %v1600
        %2244 = vmatprep.subr.bf16.mxu0 0
        %2245 = vmatpush1.bf16.msra.mxu0 %v1599
        %2246 = vmatprep.subr.bf16.mxu0 0
        %2247 = vmatpush1.bf16.msra.mxu0 %v1598
        %2248 = vmatprep.subr.bf16.mxu0 0
        %2249 = vmatpush1.bf16.msra.mxu0 %v1597
        %2250 = vmatprep.subr.bf16.mxu0 0
        %2251 = vmatpush1.bf16.msra.mxu0 %v1596
        %2252 = vmatprep.subr.bf16.mxu0 0
        %2253 = vmatpush1.bf16.msra.mxu0 %v1595
        %2254 = vmatprep.subr.bf16.mxu0 0
        %2255 = vmatpush1.bf16.msra.mxu0 %v1594
        %2256 = vmatprep.subr.bf16.mxu0 0
        %2257 = vmatpush2.bf16.msra.mxu0 %v1609
        %2258 = vmatprep.subr.bf16.mxu0 0
        %2259 = vmatpush2.bf16.msra.mxu0 %v1608
        %2260 = vmatprep.subr.bf16.mxu0 0
        %2261 = vmatpush2.bf16.msra.mxu0 %v1607
        %2262 = vmatprep.subr.bf16.mxu0 0
        %2263 = vmatpush2.bf16.msra.mxu0 %v1606
        %2264 = vmatprep.subr.bf16.mxu0 0
        %2265 = vmatpush2.bf16.msra.mxu0 %v1605
        %2266 = vmatprep.subr.bf16.mxu0 0
        %2267 = vmatpush2.bf16.msra.mxu0 %v1604
        %2268 = vmatprep.subr.bf16.mxu0 0
        %2269 = vmatpush2.bf16.msra.mxu0 %v1603
        %2270 = vmatprep.subr.bf16.mxu0 0
        %2271 = vmatpush2.bf16.msra.mxu0 %v1602
        %2272 = vmatprep.mubr.bf16.mxu0 %v247
        %2273 = vmatmul.mubr.bf16.gmra.mxu0 %v246
        %v2274 = vpop.f32.mrf.mxu0
        %v2275 = vadd.f32 %v2234, %v2274
        %v2276 = vpop.f32.mrf.mxu0
        %v2277 = vpop.f32.mrf.mxu0
        %v2278 = vadd.f32 %v2237, %v2277
        %v2279 = vpop.f32.mrf.mxu0
        %2280 = vdwg.mxu0
        %2281 = vmatprep.subr.bf16.mxu0 0
        %2282 = vmatpush1.bf16.msra.mxu0 %v1617
        %2283 = vmatprep.subr.bf16.mxu0 0
        %2284 = vmatpush1.bf16.msra.mxu0 %v1616
        %2285 = vmatprep.subr.bf16.mxu0 0
        %2286 = vmatpush1.bf16.msra.mxu0 %v1615
        %2287 = vmatprep.subr.bf16.mxu0 0
        %2288 = vmatpush1.bf16.msra.mxu0 %v1614
        %2289 = vmatprep.subr.bf16.mxu0 0
        %2290 = vmatpush1.bf16.msra.mxu0 %v1613
        %2291 = vmatprep.subr.bf16.mxu0 0
        %2292 = vmatpush1.bf16.msra.mxu0 %v1612
        %2293 = vmatprep.subr.bf16.mxu0 0
        %2294 = vmatpush1.bf16.msra.mxu0 %v1611
        %2295 = vmatprep.subr.bf16.mxu0 0
        %2296 = vmatpush1.bf16.msra.mxu0 %v1610
        %2297 = vmatprep.subr.bf16.mxu0 0
        %2298 = vmatpush2.bf16.msra.mxu0 %v1625
        %2299 = vmatprep.subr.bf16.mxu0 0
        %2300 = vmatpush2.bf16.msra.mxu0 %v1624
        %2301 = vmatprep.subr.bf16.mxu0 0
        %2302 = vmatpush2.bf16.msra.mxu0 %v1623
        %2303 = vmatprep.subr.bf16.mxu0 0
        %2304 = vmatpush2.bf16.msra.mxu0 %v1622
        %2305 = vmatprep.subr.bf16.mxu0 0
        %2306 = vmatpush2.bf16.msra.mxu0 %v1621
        %2307 = vmatprep.subr.bf16.mxu0 0
        %2308 = vmatpush2.bf16.msra.mxu0 %v1620
        %2309 = vmatprep.subr.bf16.mxu0 0
        %2310 = vmatpush2.bf16.msra.mxu0 %v1619
        %2311 = vmatprep.subr.bf16.mxu0 0
        %2312 = vmatpush2.bf16.msra.mxu0 %v1618
        %2313 = vmatprep.mubr.bf16.mxu0 %v249
        %2314 = vmatmul.mubr.bf16.gmra.mxu0 %v248
        %v2315 = vpop.f32.mrf.mxu0
        %v2316 = vadd.f32 %v2275, %v2315
        %v2317 = vpop.f32.mrf.mxu0
        %v2318 = vpop.f32.mrf.mxu0
        %v2319 = vadd.f32 %v2278, %v2318
        %v2320 = vpop.f32.mrf.mxu0
        %2321 = vdwg.mxu0
        %2322 = vmatprep.subr.bf16.mxu0 0
        %2323 = vmatpush1.bf16.msra.mxu0 0
        %2324 = vmatprep.subr.bf16.mxu0 0
        %2325 = vmatpush1.bf16.msra.mxu0 0
        %2326 = vmatprep.subr.bf16.mxu0 0
        %2327 = vmatpush1.bf16.msra.mxu0 0
        %2328 = vmatprep.subr.bf16.mxu0 0
        %2329 = vmatpush1.bf16.msra.mxu0 0
        %2330 = vmatprep.subr.bf16.mxu0 0
        %2331 = vmatpush1.bf16.msra.mxu0 %v1629
        %2332 = vmatprep.subr.bf16.mxu0 0
        %2333 = vmatpush1.bf16.msra.mxu0 %v1628
        %2334 = vmatprep.subr.bf16.mxu0 0
        %2335 = vmatpush1.bf16.msra.mxu0 %v1627
        %2336 = vmatprep.subr.bf16.mxu0 0
        %2337 = vmatpush1.bf16.msra.mxu0 %v1626
        %2338 = vmatprep.subr.bf16.mxu0 0
        %2339 = vmatpush2.bf16.msra.mxu0 0
        %2340 = vmatprep.subr.bf16.mxu0 0
        %2341 = vmatpush2.bf16.msra.mxu0 0
        %2342 = vmatprep.subr.bf16.mxu0 0
        %2343 = vmatpush2.bf16.msra.mxu0 0
        %2344 = vmatprep.subr.bf16.mxu0 0
        %2345 = vmatpush2.bf16.msra.mxu0 0
        %2346 = vmatprep.subr.bf16.mxu0 0
        %2347 = vmatpush2.bf16.msra.mxu0 0
        %2348 = vmatprep.subr.bf16.mxu0 0
        %2349 = vmatpush2.bf16.msra.mxu0 0
        %2350 = vmatprep.subr.bf16.mxu0 0
        %2351 = vmatpush2.bf16.msra.mxu0 0
        %2352 = vmatprep.subr.bf16.mxu0 0
        %2353 = vmatpush2.bf16.msra.mxu0 0
        %2354 = vmatprep.mubr.bf16.mxu0 0
        %2355 = vmatmul.mubr.bf16.gmra.mxu0 %v1828
        %v2356 = vpop.f32.mrf.mxu0
        %v2357 = vadd.f32 %v2316, %v2356
        %v2358 = vpop.f32.mrf.mxu0
        %v2359 = vpop.f32.mrf.mxu0
        %v2360 = vadd.f32 %v2319, %v2359
        %v2361 = vpop.f32.mrf.mxu0
        %2362 = vdwg.mxu0
        %2363 = vst [vmem:[%s166] sm:$0xff] %v2357
        %2364 = vst [vmem:[%s166 + $0x8] sm:$0xff] %v2360
        %s2365 = sand.u32 %s93, 1
        %s2366 = scalar_lea.sflag [#allocation3], %s2365
        %s2367 = sand.u32 %s93, 1
        %s2368 = smul.addr %s2367, 16
        %s2369 = scalar_lea.vmem [#allocation2], %s2368
        // Predicated region
        $region33: #{ms_task_forward.1} parent=31 // pred_check
          %p2370 = pneg %p103
        $region34: #{ms_task_forward.1} parent=31 // pred_check_branch
          %2372 = sbr.rel (%p2370) target = $region36
        $region35: #{ms_task_forward.1} parent=31 // pred_region
          %s2373 = smul.u32 2, %s17
          %s2375 = ssub.s32 256, 256
          %2376 = vsyncadd %s2366, %s2375
          %s2377 = smul.addr %s2373, 128
          %s2378 = scalar_lea.hbm %s3, %s2377
          %s2379 = sshll.u32 %s2369, 4
          %s2380 = int_to_ptr.vmem [resolvable:$true] %s2379
          %2385 = dma.vmem_to_hbm [thread:$0]  %s2380, 256, %s2378, %s2366, 128, 128, 8
        $region36: #{ms_task_forward.1} parent=31 // pred_fallthru
          _
      $region32: #{ms_task_forward.1} parent=5 // pred_fallthru
        _
      %p2386 = scmp.le.s32.totalorder 2, %s12
      // Predicated region
      $region37: #{ms_task_forward.1} parent=5 // pred_check
        %p2387 = pneg %p2386
      $region38: #{ms_task_forward.1} parent=5 // pred_check_branch
        %2389 = sbr.rel (%p2387) target = $region40
      $region39: #{ms_task_forward.1} parent=5 // pred_region
        %s2390 = ssub.s32 %s12, 2
        // Predicated region
        $region41: #{ms_task_forward.1} parent=39 // pred_check
          %p2391 = pneg %p109
        $region42: #{ms_task_forward.1} parent=39 // pred_check_branch
          %2393 = sbr.rel (%p2391) target = $region44
        $region43: #{ms_task_forward.1} parent=39 // pred_region
          %s2394 = sand.u32 %s94, 1
          %s2395 = scalar_lea.sflag [#allocation3], %s2394
          %s2396 = sand.u32 %s94, 1
          %s2397 = smul.addr %s2396, 16
          %s2398 = scalar_lea.vmem [#allocation2], %s2397
          %2399 = dma.done %s2395, 256
        $region44: #{ms_task_forward.1} parent=39 // pred_fallthru
          _
      $region40: #{ms_task_forward.1} parent=5 // pred_fallthru
        _
    $region6: #{ms_task_forward.1} parent=1 // loop_footer
      %s16 = sadd.s32 1, %s12
    $region7: #{ms_task_forward.1} parent=1 // loop_footer_branch
      %11 = sbr.rel target = $region3
    $region8: #{ms_task_forward.1} parent=1 // loop_exit
      _
    %2400 = vsyncpa [#allocation3], 1
    %s2401 = scalar_lea.sflag [#allocation3], 1
    %2402 = vsyncpa %s2401, 1

</llo_original>
